<compile_context>
chip_gen: v7x
topology: tpu7x:2x2x1
jax: 0.10.0
libtpu: 0.0.40
codegen_flags: <defaults>
</compile_context>

<pallas_src>
import math

import jax
import jax.numpy as jnp
from jax.experimental import pallas as pl
from jax.experimental.pallas import tpu as pltpu


# ----------------------------- math helpers -----------------------------

def sphy_coeff(l, m):
    numerator = (2.0 * l + 1.0) * math.factorial(l - m)
    denominator = 4.0 * math.pi * math.factorial(l + m)
    return (-1.0) ** m * math.sqrt(numerator / denominator)


def legendre_p(l, m, x):
    """Recursive associated Legendre (m >= 0); used only by the pure-JAX reference."""
    assert 0 <= m <= l
    if l == 0:
        return jnp.ones_like(x)
    elif l == 1:
        if m == 1:
            return -jnp.sqrt(1.0 - x * x)
        if m == 0:
            return x
    elif l == 2:
        if m == 2:
            return 3.0 * (1.0 - x * x)
        if m == 1:
            return -3.0 * x * jnp.sqrt(1.0 - x * x)
        if m == 0:
            return 0.5 * (3.0 * x * x - 1.0)
    else:
        if l == m:
            return -(2.0 * l - 1.0) * jnp.sqrt(1.0 - x * x) * legendre_p(l - 1, l - 1, x)
        elif l == m + 1:
            return x * (2.0 * l - 1.0) * legendre_p(l - 1, l - 1, x)
        else:
            prefac = 1.0 / float(l - m)
            return prefac * ((2.0 * l - 1.0) * x * legendre_p(l - 1, m, x)
                             - (l - 1.0 + m) * legendre_p(l - 2, m, x))


def num_coeffs(lmax):
    return (lmax + 1) ** 2


def _round_up(x, m):
    return ((x + m - 1) // m) * m


# ----------------------------- Pallas kernel -----------------------------

def make_spherical_ft(lmax, B, N, C, dtype=jnp.float32, b_block=8, n_block=512):
    K = num_coeffs(lmax)
    Kpad = _round_up(K, 8)
    Bblk = b_block
    Bpad = _round_up(max(B, 1), Bblk)
    Ntile = min(_round_up(max(N, 1), 128), _round_up(n_block, 128))
    Npad = _round_up(max(N, 1), Ntile)

    coeffs = {(0, 0): sphy_coeff(0, 0)}
    for l in range(1, lmax + 1):
        for m in range(0, l + 1):
            coeffs[(l, m)] = sphy_coeff(l, m)

    def kernel(theta_ref, phi_ref, areas_ref, values_ref, out_ref, w_ref, acc_ref):
        n_id = pl.program_id(1)
        n_last = pl.num_programs(1) - 1

        @pl.when(n_id == 0)
        def _init_acc():
            acc_ref[...] = jnp.zeros_like(acc_ref)

        if Kpad > K:
            # Scratch persists across all grid steps: zero the padding rows once.
            @pl.when((pl.program_id(0) == 0) & (n_id == 0))
            def _zero_pad_rows():
                w_ref[K:Kpad, :, :] = jnp.zeros((Kpad - K, Bblk, Ntile), w_ref.dtype)

        theta = theta_ref[...]                      # (Bblk, Ntile)
        phi = phi_ref[...]                          # (Bblk, Ntile)
        areas = areas_ref[...]                      # (Bblk, Ntile)
        # Fold areas into the values once (C vmuls) rather than into K W rows.
        av = values_ref[...] * areas[:, None, :]    # (Bblk, C, Ntile)

        # ---- transcendentals: 4 EUP vreg-ops per block ----
        x = jnp.cos(theta)                          # cos(theta)
        sin_theta = jnp.sin(theta)                  # == sqrt(1-x^2) for theta in [0, pi]
        cos1 = jnp.cos(phi)
        sin1 = jnp.sin(phi)

        # cos(m*phi)/sin(m*phi) via angle addition (VALU work, not EUP).
        cos_m, sin_m = {}, {}
        if lmax >= 1:
            cos_m[1], sin_m[1] = cos1, sin1
        for m in range(2, lmax + 1):
            cos_m[m] = cos_m[m - 1] * cos1 - sin_m[m - 1] * sin1
            sin_m[m] = sin_m[m - 1] * cos1 + cos_m[m - 1] * sin1

        # l = 0 row: P_0^0 == 1 -> just the constant coefficient.
        w_ref[0, :, :] = jnp.full((Bblk, Ntile), coeffs[(0, 0)], dtype=w_ref.dtype)

        # Associated-Legendre recurrence fused with the W-row stores; only
        # degrees l-1 and l-2 stay live.
        leg_prev1 = {0: jnp.ones_like(x)}   # P_{l-1}^m
        leg_prev2 = {}                      # P_{l-2}^m
        k = 1
        for l in range(1, lmax + 1):
            leg = {}
            leg[l] = -(2.0 * l - 1.0) * sin_theta * leg_prev1[l - 1]
            leg[l - 1] = (2.0 * l - 1.0) * x * leg_prev1[l - 1]
            for m in range(l - 2, -1, -1):
                leg[m] = ((2.0 * l - 1.0) * x * leg_prev1[m]
                          - (l - 1.0 + m) * leg_prev2[m]) / float(l - m)

            # Each row store is a full unmasked (Bblk, Ntile) tile.
            w_ref[k, :, :] = coeffs[(l, 0)] * leg[0]
            k += 1
            for m in range(1, l + 1):
                base = coeffs[(l, m)] * leg[m]
                w_ref[k, :, :] = base * cos_m[m]        # real part
                w_ref[k + 1, :, :] = -base * sin_m[m]   # imag part of exp(-i m phi)
                k += 2

            leg_prev2 = leg_prev1
            leg_prev1 = leg

        # ---- reduction over this N tile: one batched MXU matmul ----
        acc_ref[...] += jnp.einsum('kbn,bcn->bkc', w_ref[...], av,
                                   preferred_element_type=jnp.float32)

        @pl.when(n_id == n_last)
        def _finalize():
            out_ref[...] = acc_ref[...].reshape(Bblk, Kpad * C).astype(out_ref.dtype)

    grid_spec = pltpu.PrefetchScalarGridSpec(
        num_scalar_prefetch=0,
        grid=(Bpad // Bblk, Npad // Ntile),     # reduction axis (N tiles) last
        in_specs=[
            pl.BlockSpec((Bblk, Ntile), lambda i, n: (i, n)),        # theta  (Bpad, Npad)
            pl.BlockSpec((Bblk, Ntile), lambda i, n: (i, n)),        # phi    (Bpad, Npad)
            pl.BlockSpec((Bblk, Ntile), lambda i, n: (i, n)),        # areas  (Bpad, Npad)
            pl.BlockSpec((Bblk, C, Ntile), lambda i, n: (i, 0, n)),  # values (Bpad, C, Npad)
        ],
        out_specs=pl.BlockSpec((Bblk, Kpad * C), lambda i, n: (i, 0)),
        scratch_shapes=[
            pltpu.VMEM((Kpad, Bblk, Ntile), jnp.float32),   # W rows (full-vreg stores)
            pltpu.VMEM((Bblk, Kpad, C), jnp.float32),       # f32 accumulator
        ],
    )

    call = pl.pallas_call(
        kernel,
        out_shape=jax.ShapeDtypeStruct((Bpad, Kpad * C), dtype),
        grid_spec=grid_spec,
        compiler_params=pltpu.CompilerParams(
            dimension_semantics=("parallel", "arbitrary")),
    )

    def spherical_ft(theta, phi, areas, values):
        # theta/phi/areas: (B, N) float32; values: (B, N, C) float32.
        pad_b, pad_n = Bpad - B, Npad - N
        if pad_b or pad_n:
            theta = jnp.pad(theta, ((0, pad_b), (0, pad_n)))
            phi = jnp.pad(phi, ((0, pad_b), (0, pad_n)))
            areas = jnp.pad(areas, ((0, pad_b), (0, pad_n)))   # zero area => zero weight
            values = jnp.pad(values, ((0, pad_b), (0, pad_n), (0, 0)))
        values_t = jnp.swapaxes(values, 1, 2)                  # (Bpad, C, Npad), lane-dense
        out_flat = call(theta, phi, areas, values_t)           # (Bpad, Kpad*C)
        return out_flat.reshape(Bpad, Kpad, C)[:B, :K, :]

    return spherical_ft


# ----------------------------- pure-JAX reference -----------------------------

def spherical_ft_reference(theta, phi, areas, values, lmax):
    theta = theta[:, :, None]
    phi = phi[:, :, None]
    areas = areas[:, :, None]
    cos_theta = jnp.cos(theta)
    results = []
    prod0 = areas * 1.0 * values
    results.append(sphy_coeff(0, 0) * jnp.sum(prod0, axis=1, keepdims=True))
    prod = areas * values
    for l in range(1, lmax + 1):
        leg = legendre_p(l, 0, cos_theta)
        results.append(sphy_coeff(l, 0) * jnp.sum(leg * prod, axis=1, keepdims=True))
        for m in range(1, l + 1):
            leg = legendre_p(l, m, cos_theta)
            expm = (jnp.cos(m * phi) - 1j * jnp.sin(m * phi)).astype(jnp.complex64)
            tmp = sphy_coeff(l, m) * jnp.sum(leg * prod * expm, axis=1, keepdims=True)
            results.append(jnp.real(tmp))
            results.append(jnp.imag(tmp))
    return jnp.concatenate(results, axis=1)


# ----------------------------- main -----------------------------

if __name__ == "__main__":
    lmax = 3
    B, N, C = 2, 128, 8
    K = num_coeffs(lmax)

    key = jax.random.PRNGKey(0)
    k1, k2, k3, k4 = jax.random.split(key, 4)
    theta = jax.random.uniform(k1, (B, N), jnp.float32,
                               minval=0.05, maxval=math.pi - 0.05)
    phi = jax.random.uniform(k2, (B, N), jnp.float32,
                             minval=0.0, maxval=2.0 * math.pi)
    areas = jax.random.uniform(k3, (B, N), jnp.float32, minval=0.1, maxval=1.0)
    values = jax.random.normal(k4, (B, N, C), jnp.float32)

    spherical_ft = make_spherical_ft(lmax, B, N, C)
    out = jax.block_until_ready(spherical_ft(theta, phi, areas, values))

    ref = spherical_ft_reference(theta, phi, areas, values, lmax)
    assert out.shape == (B, K, C), out.shape
    err = float(jnp.max(jnp.abs(out - ref)))
    assert jnp.allclose(out, ref, rtol=1e-4, atol=1e-4), err

    print("KERNEL_OK")
</pallas_src>

<mosaic_0001>
module attributes {stable_mosaic.version = 11 : i64} {
  func.func @kernel(%arg0: i32, %arg1: i32, %arg2: memref<8x128xf32, #tpu.memory_space<vmem>>, %arg3: memref<8x128xf32, #tpu.memory_space<vmem>>, %arg4: memref<8x128xf32, #tpu.memory_space<vmem>>, %arg5: memref<8x8x128xf32, #tpu.memory_space<vmem>>, %arg6: memref<8x128xf32, #tpu.memory_space<vmem>>, %arg7: memref<16x8x128xf32, #tpu.memory_space<vmem>>, %arg8: memref<8x16x8xf32, #tpu.memory_space<vmem>>) attributes {dimension_semantics = [#tpu.dimension_semantics<parallel>, #tpu.dimension_semantics<arbitrary>], iteration_bounds = array<i64: 1, 1>, scalar_prefetch = 0 : i64, scratch_operands = 2 : i64, tpu.core_type = #tpu.core_type<tc>, window_params = [{transform_indices = @transform_0, window_bounds = array<i64: 8, 128>}, {transform_indices = @transform_1, window_bounds = array<i64: 8, 128>}, {transform_indices = @transform_2, window_bounds = array<i64: 8, 128>}, {transform_indices = @transform_3, window_bounds = array<i64: 8, 8, 128>}, {transform_indices = @transform_4, window_bounds = array<i64: 8, 128>}]} {
    %c0_i32 = arith.constant 0 : i32
    %0 = arith.cmpi eq, %arg1, %c0_i32 : i32
    %1 = arith.extui %0 : i1 to i32
    %c0_i32_0 = arith.constant 0 : i32
    %2 = arith.cmpi ne, %1, %c0_i32_0 : i32
    scf.if %2 {
      %cst_85 = arith.constant 0.000000e+00 : f32
      %168 = vector.broadcast %cst_85 : f32 to vector<8x16x8xf32>
      %c0_86 = arith.constant 0 : index
      %c0_87 = arith.constant 0 : index
      %c0_88 = arith.constant 0 : index
      %169 = vector.load %arg8[%c0_86, %c0_87, %c0_88] : memref<8x16x8xf32, #tpu.memory_space<vmem>>, vector<8x16x8xf32>
      tpu.vector_store %arg8[%c0_86, %c0_87, %c0_88], %168 {strides = array<i32>} : memref<8x16x8xf32, #tpu.memory_space<vmem>>, vector<8x16x8xf32>,
    } else {
    }
    %c0 = arith.constant 0 : index
    %c0_1 = arith.constant 0 : index
    %3 = vector.load %arg2[%c0, %c0_1] : memref<8x128xf32, #tpu.memory_space<vmem>>, vector<8x128xf32>
    %c0_2 = arith.constant 0 : index
    %c0_3 = arith.constant 0 : index
    %4 = vector.load %arg3[%c0_2, %c0_3] : memref<8x128xf32, #tpu.memory_space<vmem>>, vector<8x128xf32>
    %c0_4 = arith.constant 0 : index
    %c0_5 = arith.constant 0 : index
    %5 = vector.load %arg4[%c0_4, %c0_5] : memref<8x128xf32, #tpu.memory_space<vmem>>, vector<8x128xf32>
    %c0_6 = arith.constant 0 : index
    %c0_7 = arith.constant 0 : index
    %c0_8 = arith.constant 0 : index
    %6 = vector.load %arg5[%c0_6, %c0_7, %c0_8] : memref<8x8x128xf32, #tpu.memory_space<vmem>>, vector<8x8x128xf32>
    %7 = vector.shape_cast %5 : vector<8x128xf32> to vector<8x1x128xf32>
    %8 = vector.broadcast %7 : vector<8x1x128xf32> to vector<8x8x128xf32>
    %9 = arith.mulf %6, %8 : vector<8x8x128xf32>
    %10 = math.cos %3 : vector<8x128xf32>
    %11 = math.sin %3 : vector<8x128xf32>
    %12 = math.cos %4 : vector<8x128xf32>
    %13 = math.sin %4 : vector<8x128xf32>
    %14 = arith.mulf %12, %12 : vector<8x128xf32>
    %15 = arith.mulf %13, %13 : vector<8x128xf32>
    %16 = arith.subf %14, %15 : vector<8x128xf32>
    %17 = arith.mulf %13, %12 : vector<8x128xf32>
    %18 = arith.mulf %12, %13 : vector<8x128xf32>
    %19 = arith.addf %17, %18 : vector<8x128xf32>
    %20 = arith.mulf %16, %12 : vector<8x128xf32>
    %21 = arith.mulf %19, %13 : vector<8x128xf32>
    %22 = arith.subf %20, %21 : vector<8x128xf32>
    %23 = arith.mulf %19, %12 : vector<8x128xf32>
    %24 = arith.mulf %16, %13 : vector<8x128xf32>
    %25 = arith.addf %23, %24 : vector<8x128xf32>
    %cst = arith.constant 0.282094806 : f32
    %26 = vector.broadcast %cst : f32 to vector<8x128xf32>
    %c0_9 = arith.constant 0 : index
    %c0_10 = arith.constant 0 : index
    %c0_11 = arith.constant 0 : index
    %27 = vector.load %arg7[%c0_9, %c0_10, %c0_11] : memref<16x8x128xf32, #tpu.memory_space<vmem>>, vector<1x8x128xf32>
    %28 = vector.shape_cast %27 : vector<1x8x128xf32> to vector<8x128xf32>
    %29 = vector.shape_cast %26 : vector<8x128xf32> to vector<1x8x128xf32>
    tpu.vector_store %arg7[%c0_9, %c0_10, %c0_11], %29 {strides = array<i32>} : memref<16x8x128xf32, #tpu.memory_space<vmem>>, vector<1x8x128xf32>,
    %cst_12 = arith.constant 1.000000e+00 : f32
    %30 = vector.broadcast %cst_12 : f32 to vector<8x128xf32>
    %cst_13 = arith.constant -1.000000e+00 : f32
    %31 = vector.broadcast %cst_13 : f32 to vector<8x128xf32>
    %32 = arith.mulf %31, %11 : vector<8x128xf32>
    %33 = arith.mulf %32, %30 : vector<8x128xf32>
    %cst_14 = arith.constant 1.000000e+00 : f32
    %34 = vector.broadcast %cst_14 : f32 to vector<8x128xf32>
    %35 = arith.mulf %34, %10 : vector<8x128xf32>
    %36 = arith.mulf %35, %30 : vector<8x128xf32>
    %cst_15 = arith.constant 0.488602519 : f32
    %37 = vector.broadcast %cst_15 : f32 to vector<8x128xf32>
    %38 = arith.mulf %37, %36 : vector<8x128xf32>
    %c1 = arith.constant 1 : index
    %c0_16 = arith.constant 0 : index
    %c0_17 = arith.constant 0 : index
    %39 = vector.load %arg7[%c1, %c0_16, %c0_17] : memref<16x8x128xf32, #tpu.memory_space<vmem>>, vector<1x8x128xf32>
    %40 = vector.shape_cast %39 : vector<1x8x128xf32> to vector<8x128xf32>
    %41 = vector.shape_cast %38 : vector<8x128xf32> to vector<1x8x128xf32>
    tpu.vector_store %arg7[%c1, %c0_16, %c0_17], %41 {strides = array<i32>} : memref<16x8x128xf32, #tpu.memory_space<vmem>>, vector<1x8x128xf32>,
    %cst_18 = arith.constant -0.345494151 : f32
    %42 = vector.broadcast %cst_18 : f32 to vector<8x128xf32>
    %43 = arith.mulf %42, %33 : vector<8x128xf32>
    %44 = arith.mulf %43, %12 : vector<8x128xf32>
    %c2 = arith.constant 2 : index
    %c0_19 = arith.constant 0 : index
    %c0_20 = arith.constant 0 : index
    %45 = vector.load %arg7[%c2, %c0_19, %c0_20] : memref<16x8x128xf32, #tpu.memory_space<vmem>>, vector<1x8x128xf32>
    %46 = vector.shape_cast %45 : vector<1x8x128xf32> to vector<8x128xf32>
    %47 = vector.shape_cast %44 : vector<8x128xf32> to vector<1x8x128xf32>
    tpu.vector_store %arg7[%c2, %c0_19, %c0_20], %47 {strides = array<i32>} : memref<16x8x128xf32, #tpu.memory_space<vmem>>, vector<1x8x128xf32>,
    %cst_21 = arith.constant 0.000000e+00 : f32
    %48 = vector.broadcast %cst_21 : f32 to vector<8x128xf32>
    %49 = arith.subf %48, %43 : vector<8x128xf32>
    %50 = arith.mulf %49, %13 : vector<8x128xf32>
    %c3 = arith.constant 3 : index
    %c0_22 = arith.constant 0 : index
    %c0_23 = arith.constant 0 : index
    %51 = vector.load %arg7[%c3, %c0_22, %c0_23] : memref<16x8x128xf32, #tpu.memory_space<vmem>>, vector<1x8x128xf32>
    %52 = vector.shape_cast %51 : vector<1x8x128xf32> to vector<8x128xf32>
    %53 = vector.shape_cast %50 : vector<8x128xf32> to vector<1x8x128xf32>
    tpu.vector_store %arg7[%c3, %c0_22, %c0_23], %53 {strides = array<i32>} : memref<16x8x128xf32, #tpu.memory_space<vmem>>, vector<1x8x128xf32>,
    %cst_24 = arith.constant -3.000000e+00 : f32
    %54 = vector.broadcast %cst_24 : f32 to vector<8x128xf32>
    %55 = arith.mulf %54, %11 : vector<8x128xf32>
    %56 = arith.mulf %55, %33 : vector<8x128xf32>
    %cst_25 = arith.constant 3.000000e+00 : f32
    %57 = vector.broadcast %cst_25 : f32 to vector<8x128xf32>
    %58 = arith.mulf %57, %10 : vector<8x128xf32>
    %59 = arith.mulf %58, %33 : vector<8x128xf32>
    %cst_26 = arith.constant 3.000000e+00 : f32
    %60 = vector.broadcast %cst_26 : f32 to vector<8x128xf32>
    %61 = arith.mulf %60, %10 : vector<8x128xf32>
    %62 = arith.mulf %61, %36 : vector<8x128xf32>
    %cst_27 = arith.constant 1.000000e+00 : f32
    %63 = vector.broadcast %cst_27 : f32 to vector<8x128xf32>
    %64 = arith.mulf %63, %30 : vector<8x128xf32>
    %65 = arith.subf %62, %64 : vector<8x128xf32>
    %cst_28 = arith.constant 2.000000e+00 : f32
    %66 = vector.broadcast %cst_28 : f32 to vector<8x128xf32>
    %67 = arith.divf %65, %66 : vector<8x128xf32>
    %cst_29 = arith.constant 0.63078314 : f32
    %68 = vector.broadcast %cst_29 : f32 to vector<8x128xf32>
    %69 = arith.mulf %68, %67 : vector<8x128xf32>
    %c4 = arith.constant 4 : index
    %c0_30 = arith.constant 0 : index
    %c0_31 = arith.constant 0 : index
    %70 = vector.load %arg7[%c4, %c0_30, %c0_31] : memref<16x8x128xf32, #tpu.memory_space<vmem>>, vector<1x8x128xf32>
    %71 = vector.shape_cast %70 : vector<1x8x128xf32> to vector<8x128xf32>
    %72 = vector.shape_cast %69 : vector<8x128xf32> to vector<1x8x128xf32>
    tpu.vector_store %arg7[%c4, %c0_30, %c0_31], %72 {strides = array<i32>} : memref<16x8x128xf32, #tpu.memory_space<vmem>>, vector<1x8x128xf32>,
    %cst_32 = arith.constant -0.257516146 : f32
    %73 = vector.broadcast %cst_32 : f32 to vector<8x128xf32>
    %74 = arith.mulf %73, %59 : vector<8x128xf32>
    %75 = arith.mulf %74, %12 : vector<8x128xf32>
    %c5 = arith.constant 5 : index
    %c0_33 = arith.constant 0 : index
    %c0_34 = arith.constant 0 : index
    %76 = vector.load %arg7[%c5, %c0_33, %c0_34] : memref<16x8x128xf32, #tpu.memory_space<vmem>>, vector<1x8x128xf32>
    %77 = vector.shape_cast %76 : vector<1x8x128xf32> to vector<8x128xf32>
    %78 = vector.shape_cast %75 : vector<8x128xf32> to vector<1x8x128xf32>
    tpu.vector_store %arg7[%c5, %c0_33, %c0_34], %78 {strides = array<i32>} : memref<16x8x128xf32, #tpu.memory_space<vmem>>, vector<1x8x128xf32>,
    %cst_35 = arith.constant 0.000000e+00 : f32
    %79 = vector.broadcast %cst_35 : f32 to vector<8x128xf32>
    %80 = arith.subf %79, %74 : vector<8x128xf32>
    %81 = arith.mulf %80, %13 : vector<8x128xf32>
    %c6 = arith.constant 6 : index
    %c0_36 = arith.constant 0 : index
    %c0_37 = arith.constant 0 : index
    %82 = vector.load %arg7[%c6, %c0_36, %c0_37] : memref<16x8x128xf32, #tpu.memory_space<vmem>>, vector<1x8x128xf32>
    %83 = vector.shape_cast %82 : vector<1x8x128xf32> to vector<8x128xf32>
    %84 = vector.shape_cast %81 : vector<8x128xf32> to vector<1x8x128xf32>
    tpu.vector_store %arg7[%c6, %c0_36, %c0_37], %84 {strides = array<i32>} : memref<16x8x128xf32, #tpu.memory_space<vmem>>, vector<1x8x128xf32>,
    %cst_38 = arith.constant 0.128758073 : f32
    %85 = vector.broadcast %cst_38 : f32 to vector<8x128xf32>
    %86 = arith.mulf %85, %56 : vector<8x128xf32>
    %87 = arith.mulf %86, %16 : vector<8x128xf32>
    %c7 = arith.constant 7 : index
    %c0_39 = arith.constant 0 : index
    %c0_40 = arith.constant 0 : index
    %88 = vector.load %arg7[%c7, %c0_39, %c0_40] : memref<16x8x128xf32, #tpu.memory_space<vmem>>, vector<1x8x128xf32>
    %89 = vector.shape_cast %88 : vector<1x8x128xf32> to vector<8x128xf32>
    %90 = vector.shape_cast %87 : vector<8x128xf32> to vector<1x8x128xf32>
    tpu.vector_store %arg7[%c7, %c0_39, %c0_40], %90 {strides = array<i32>} : memref<16x8x128xf32, #tpu.memory_space<vmem>>, vector<1x8x128xf32>,
    %cst_41 = arith.constant 0.000000e+00 : f32
    %91 = vector.broadcast %cst_41 : f32 to vector<8x128xf32>
    %92 = arith.subf %91, %86 : vector<8x128xf32>
    %93 = arith.mulf %92, %19 : vector<8x128xf32>
    %c8 = arith.constant 8 : index
    %c0_42 = arith.constant 0 : index
    %c0_43 = arith.constant 0 : index
    %94 = vector.load %arg7[%c8, %c0_42, %c0_43] : memref<16x8x128xf32, #tpu.memory_space<vmem>>, vector<1x8x128xf32>
    %95 = vector.shape_cast %94 : vector<1x8x128xf32> to vector<8x128xf32>
    %96 = vector.shape_cast %93 : vector<8x128xf32> to vector<1x8x128xf32>
    tpu.vector_store %arg7[%c8, %c0_42, %c0_43], %96 {strides = array<i32>} : memref<16x8x128xf32, #tpu.memory_space<vmem>>, vector<1x8x128xf32>,
    %cst_44 = arith.constant -5.000000e+00 : f32
    %97 = vector.broadcast %cst_44 : f32 to vector<8x128xf32>
    %98 = arith.mulf %97, %11 : vector<8x128xf32>
    %99 = arith.mulf %98, %56 : vector<8x128xf32>
    %cst_45 = arith.constant 5.000000e+00 : f32
    %100 = vector.broadcast %cst_45 : f32 to vector<8x128xf32>
    %101 = arith.mulf %100, %10 : vector<8x128xf32>
    %102 = arith.mulf %101, %56 : vector<8x128xf32>
    %cst_46 = arith.constant 5.000000e+00 : f32
    %103 = vector.broadcast %cst_46 : f32 to vector<8x128xf32>
    %104 = arith.mulf %103, %10 : vector<8x128xf32>
    %105 = arith.mulf %104, %59 : vector<8x128xf32>
    %cst_47 = arith.constant 3.000000e+00 : f32
    %106 = vector.broadcast %cst_47 : f32 to vector<8x128xf32>
    %107 = arith.mulf %106, %33 : vector<8x128xf32>
    %108 = arith.subf %105, %107 : vector<8x128xf32>
    %cst_48 = arith.constant 2.000000e+00 : f32
    %109 = vector.broadcast %cst_48 : f32 to vector<8x128xf32>
    %110 = arith.divf %108, %109 : vector<8x128xf32>
    %cst_49 = arith.constant 5.000000e+00 : f32
    %111 = vector.broadcast %cst_49 : f32 to vector<8x128xf32>
    %112 = arith.mulf %111, %10 : vector<8x128xf32>
    %113 = arith.mulf %112, %67 : vector<8x128xf32>
    %cst_50 = arith.constant 2.000000e+00 : f32
    %114 = vector.broadcast %cst_50 : f32 to vector<8x128xf32>
    %115 = arith.mulf %114, %36 : vector<8x128xf32>
    %116 = arith.subf %113, %115 : vector<8x128xf32>
    %cst_51 = arith.constant 3.000000e+00 : f32
    %117 = vector.broadcast %cst_51 : f32 to vector<8x128xf32>
    %118 = arith.divf %116, %117 : vector<8x128xf32>
    %cst_52 = arith.constant 0.746352672 : f32
    %119 = vector.broadcast %cst_52 : f32 to vector<8x128xf32>
    %120 = arith.mulf %119, %118 : vector<8x128xf32>
    %c9 = arith.constant 9 : index
    %c0_53 = arith.constant 0 : index
    %c0_54 = arith.constant 0 : index
    %121 = vector.load %arg7[%c9, %c0_53, %c0_54] : memref<16x8x128xf32, #tpu.memory_space<vmem>>, vector<1x8x128xf32>
    %122 = vector.shape_cast %121 : vector<1x8x128xf32> to vector<8x128xf32>
    %123 = vector.shape_cast %120 : vector<8x128xf32> to vector<1x8x128xf32>
    tpu.vector_store %arg7[%c9, %c0_53, %c0_54], %123 {strides = array<i32>} : memref<16x8x128xf32, #tpu.memory_space<vmem>>, vector<1x8x128xf32>,
    %cst_55 = arith.constant -0.215453461 : f32
    %124 = vector.broadcast %cst_55 : f32 to vector<8x128xf32>
    %125 = arith.mulf %124, %110 : vector<8x128xf32>
    %126 = arith.mulf %125, %12 : vector<8x128xf32>
    %c10 = arith.constant 10 : index
    %c0_56 = arith.constant 0 : index
    %c0_57 = arith.constant 0 : index
    %127 = vector.load %arg7[%c10, %c0_56, %c0_57] : memref<16x8x128xf32, #tpu.memory_space<vmem>>, vector<1x8x128xf32>
    %128 = vector.shape_cast %127 : vector<1x8x128xf32> to vector<8x128xf32>
    %129 = vector.shape_cast %126 : vector<8x128xf32> to vector<1x8x128xf32>
    tpu.vector_store %arg7[%c10, %c0_56, %c0_57], %129 {strides = array<i32>} : memref<16x8x128xf32, #tpu.memory_space<vmem>>, vector<1x8x128xf32>,
    %cst_58 = arith.constant 0.000000e+00 : f32
    %130 = vector.broadcast %cst_58 : f32 to vector<8x128xf32>
    %131 = arith.subf %130, %125 : vector<8x128xf32>
    %132 = arith.mulf %131, %13 : vector<8x128xf32>
    %c11 = arith.constant 11 : index
    %c0_59 = arith.constant 0 : index
    %c0_60 = arith.constant 0 : index
    %133 = vector.load %arg7[%c11, %c0_59, %c0_60] : memref<16x8x128xf32, #tpu.memory_space<vmem>>, vector<1x8x128xf32>
    %134 = vector.shape_cast %133 : vector<1x8x128xf32> to vector<8x128xf32>
    %135 = vector.shape_cast %132 : vector<8x128xf32> to vector<1x8x128xf32>
    tpu.vector_store %arg7[%c11, %c0_59, %c0_60], %135 {strides = array<i32>} : memref<16x8x128xf32, #tpu.memory_space<vmem>>, vector<1x8x128xf32>,
    %cst_61 = arith.constant 0.0681323633 : f32
    %136 = vector.broadcast %cst_61 : f32 to vector<8x128xf32>
    %137 = arith.mulf %136, %102 : vector<8x128xf32>
    %138 = arith.mulf %137, %16 : vector<8x128xf32>
    %c12 = arith.constant 12 : index
    %c0_62 = arith.constant 0 : index
    %c0_63 = arith.constant 0 : index
    %139 = vector.load %arg7[%c12, %c0_62, %c0_63] : memref<16x8x128xf32, #tpu.memory_space<vmem>>, vector<1x8x128xf32>
    %140 = vector.shape_cast %139 : vector<1x8x128xf32> to vector<8x128xf32>
    %141 = vector.shape_cast %138 : vector<8x128xf32> to vector<1x8x128xf32>
    tpu.vector_store %arg7[%c12, %c0_62, %c0_63], %141 {strides = array<i32>} : memref<16x8x128xf32, #tpu.memory_space<vmem>>, vector<1x8x128xf32>,
    %cst_64 = arith.constant 0.000000e+00 : f32
    %142 = vector.broadcast %cst_64 : f32 to vector<8x128xf32>
    %143 = arith.subf %142, %137 : vector<8x128xf32>
    %144 = arith.mulf %143, %19 : vector<8x128xf32>
    %c13 = arith.constant 13 : index
    %c0_65 = arith.constant 0 : index
    %c0_66 = arith.constant 0 : index
    %145 = vector.load %arg7[%c13, %c0_65, %c0_66] : memref<16x8x128xf32, #tpu.memory_space<vmem>>, vector<1x8x128xf32>
    %146 = vector.shape_cast %145 : vector<1x8x128xf32> to vector<8x128xf32>
    %147 = vector.shape_cast %144 : vector<8x128xf32> to vector<1x8x128xf32>
    tpu.vector_store %arg7[%c13, %c0_65, %c0_66], %147 {strides = array<i32>} : memref<16x8x128xf32, #tpu.memory_space<vmem>>, vector<1x8x128xf32>,
    %cst_67 = arith.constant -0.027814921 : f32
    %148 = vector.broadcast %cst_67 : f32 to vector<8x128xf32>
    %149 = arith.mulf %148, %99 : vector<8x128xf32>
    %150 = arith.mulf %149, %22 : vector<8x128xf32>
    %c14 = arith.constant 14 : index
    %c0_68 = arith.constant 0 : index
    %c0_69 = arith.constant 0 : index
    %151 = vector.load %arg7[%c14, %c0_68, %c0_69] : memref<16x8x128xf32, #tpu.memory_space<vmem>>, vector<1x8x128xf32>
    %152 = vector.shape_cast %151 : vector<1x8x128xf32> to vector<8x128xf32>
    %153 = vector.shape_cast %150 : vector<8x128xf32> to vector<1x8x128xf32>
    tpu.vector_store %arg7[%c14, %c0_68, %c0_69], %153 {strides = array<i32>} : memref<16x8x128xf32, #tpu.memory_space<vmem>>, vector<1x8x128xf32>,
    %cst_70 = arith.constant 0.000000e+00 : f32
    %154 = vector.broadcast %cst_70 : f32 to vector<8x128xf32>
    %155 = arith.subf %154, %149 : vector<8x128xf32>
    %156 = arith.mulf %155, %25 : vector<8x128xf32>
    %c15 = arith.constant 15 : index
    %c0_71 = arith.constant 0 : index
    %c0_72 = arith.constant 0 : index
    %157 = vector.load %arg7[%c15, %c0_71, %c0_72] : memref<16x8x128xf32, #tpu.memory_space<vmem>>, vector<1x8x128xf32>
    %158 = vector.shape_cast %157 : vector<1x8x128xf32> to vector<8x128xf32>
    %159 = vector.shape_cast %156 : vector<8x128xf32> to vector<1x8x128xf32>
    tpu.vector_store %arg7[%c15, %c0_71, %c0_72], %159 {strides = array<i32>} : memref<16x8x128xf32, #tpu.memory_space<vmem>>, vector<1x8x128xf32>,
    %c0_73 = arith.constant 0 : index
    %c0_74 = arith.constant 0 : index
    %c0_75 = arith.constant 0 : index
    %160 = vector.load %arg8[%c0_73, %c0_74, %c0_75] : memref<8x16x8xf32, #tpu.memory_space<vmem>>, vector<8x16x8xf32>
    %c0_76 = arith.constant 0 : index
    %c0_77 = arith.constant 0 : index
    %c0_78 = arith.constant 0 : index
    %161 = vector.load %arg7[%c0_76, %c0_77, %c0_78] : memref<16x8x128xf32, #tpu.memory_space<vmem>>, vector<16x8x128xf32>
    "tpu.trace_start"() <{level = 10 : i32, message = "kbn,bcn->bkc"}> : () -> ()
    %cst_79 = arith.constant dense<0.000000e+00> : vector<8x16x8xf32>
    %162 = tpu.matmul %161, %9, %cst_79 {dimension_numbers = #tpu.dot_dimension_numbers<[2], [2], [0], [1], [0, 1, 0, 0, 1, 1], [1], [0]>} : vector<16x8x128xf32>, vector<8x8x128xf32>, vector<8x16x8xf32> -> vector<8x16x8xf32>
    "tpu.trace_stop"() : () -> ()
    %163 = arith.addf %160, %162 : vector<8x16x8xf32>
    %c0_80 = arith.constant 0 : index
    %c0_81 = arith.constant 0 : index
    %c0_82 = arith.constant 0 : index
    %164 = vector.load %arg8[%c0_80, %c0_81, %c0_82] : memref<8x16x8xf32, #tpu.memory_space<vmem>>, vector<8x16x8xf32>
    tpu.vector_store %arg8[%c0_80, %c0_81, %c0_82], %163 {strides = array<i32>} : memref<8x16x8xf32, #tpu.memory_space<vmem>>, vector<8x16x8xf32>,
    %c0_i32_83 = arith.constant 0 : i32
    %165 = arith.cmpi eq, %arg1, %c0_i32_83 : i32
    %166 = arith.extui %165 : i1 to i32
    %c0_i32_84 = arith.constant 0 : i32
    %167 = arith.cmpi ne, %166, %c0_i32_84 : i32
    scf.if %167 {
      %c0_85 = arith.constant 0 : index
      %c0_86 = arith.constant 0 : index
      %c0_87 = arith.constant 0 : index
      %168 = vector.load %arg8[%c0_85, %c0_86, %c0_87] : memref<8x16x8xf32, #tpu.memory_space<vmem>>, vector<8x16x8xf32>
      %169 = vector.shape_cast %168 : vector<8x16x8xf32> to vector<8x128xf32>
      %c0_88 = arith.constant 0 : index
      %c0_89 = arith.constant 0 : index
      %170 = vector.load %arg6[%c0_88, %c0_89] : memref<8x128xf32, #tpu.memory_space<vmem>>, vector<8x128xf32>
      tpu.vector_store %arg6[%c0_88, %c0_89], %169 {strides = array<i32>} : memref<8x128xf32, #tpu.memory_space<vmem>>, vector<8x128xf32>,
    } else {
    }
    return
  }
  func.func @transform_0(%arg0: i32, %arg1: i32) -> (i32, i32) {
    %c0_i32 = arith.constant 0 : i32
    return %arg0, %arg1 : i32, i32
  }
  func.func @transform_1(%arg0: i32, %arg1: i32) -> (i32, i32) {
    %c0_i32 = arith.constant 0 : i32
    return %arg0, %arg1 : i32, i32
  }
  func.func @transform_2(%arg0: i32, %arg1: i32) -> (i32, i32) {
    %c0_i32 = arith.constant 0 : i32
    return %arg0, %arg1 : i32, i32
  }
  func.func @transform_3(%arg0: i32, %arg1: i32) -> (i32, i32, i32) {
    %c0_i32 = arith.constant 0 : i32
    %c0_i32_0 = arith.constant 0 : i32
    return %arg0, %c0_i32, %arg1 : i32, i32, i32
  }
  func.func @transform_4(%arg0: i32, %arg1: i32) -> (i32, i32) {
    %c0_i32 = arith.constant 0 : i32
    %c0_i32_0 = arith.constant 0 : i32
    return %arg0, %c0_i32 : i32, i32
  }
}

</mosaic_0001>

<llo_original>
// kernel: tpu_custom_call.1
$region0: #{tpu_custom_call.1}
  #allocation0 [shape = 'u32[]', space=smem, size = 0x4, offset = 0x4, fixed_abs, tag = 'smem constant byte address 0x4 - core index']
  #allocation1 [shape = 'u32[144,128]{1,0:T(1,128)}', space=vmem, size = 0x12000, scoped, tag = 'internal scratch']
  #allocation2 [shape = 'f32[16,8,128]{2,1,0:T(8,128)}', space=vmem, size = 0x10000, scoped, tag = 'scratch operand']
  #allocation3 [shape = 'f32[8,16,8]{2,1,0:T(8,128)}', space=vmem, size = 0x10000, scoped, tag = 'scratch operand']
  %s0 = inlined_call_operand.hbm [shape: f32[8,128], index: 0, kind: input, shape index: {}]
  %s1 = inlined_call_operand.hbm [shape: f32[8,128], index: 1, kind: input, shape index: {}]
  %s2 = inlined_call_operand.hbm [shape: f32[8,128], index: 2, kind: input, shape index: {}]
  %s3 = inlined_call_operand.hbm [shape: f32[8,8,128], index: 3, kind: input, shape index: {}]
  %s4 = inlined_call_operand.hbm [shape: f32[8,128], index: 4, kind: output, shape index: {}]
  %s5 = sld [smem:[#allocation0]]
  $region50: #{tpu_custom_call.1} parent=0
    _
  %s7 = ssub.s32 1, %s5
  %s8 = scalar_select 0, %s7, %s5
  $region1: #{tpu_custom_call.1} parent=0
    #allocation4 [shape = 'u8[4096]{0}', space=vmem, size = 0x1000, scoped, tag = 'input window, operand 0, single buffered']
    #allocation5 [shape = 's32[1]{0}', space=sflag, size = 0x4, scoped, tag = 'scoped memory for tpu_custom_call.1']
    #allocation6 [shape = 's32[1]{0}', space=sflag, size = 0x4, scoped, tag = 'scoped memory for tpu_custom_call.1']
    #allocation7 [shape = 'u8[4096]{0}', space=vmem, size = 0x1000, scoped, tag = 'input window, operand 1, single buffered']
    #allocation8 [shape = 's32[1]{0}', space=sflag, size = 0x4, scoped, tag = 'scoped memory for tpu_custom_call.1']
    #allocation9 [shape = 'u8[4096]{0}', space=vmem, size = 0x1000, scoped, tag = 'input window, operand 2, single buffered']
    #allocation10 [shape = 'u8[32768]{0}', space=vmem, size = 0x8000, scoped, tag = 'input window, operand 3, single buffered']
    #allocation11 [shape = 's32[1]{0}', space=sflag, size = 0x4, scoped, tag = 'scoped memory for tpu_custom_call.1']
    #allocation12 [shape = 'u8[4096]{0}', space=vmem, size = 0x1000, scoped, tag = 'output window, operand 0, single buffered']
    %9 = vsyncpa [#allocation5], 0
    %10 = vsyncpa [#allocation8], 0
    %11 = vsyncpa [#allocation11], 0
    %12 = vsyncpa [#allocation6], 0
    // Predicated region
    $region2: #{tpu_custom_call.1} parent=1 // pred_check
      _
    $region3: #{tpu_custom_call.1} parent=1 // pred_check_branch
      %14 = sbr.rel (0) target = $region5
    $region4: #{tpu_custom_call.1} parent=1 // pred_region
      %s16 = ssub.s32 128, 128
      %17 = vsyncadd [#allocation5], %s16
      %s19 = sshll.u32 [#allocation4], 4
      %s20 = int_to_ptr.vmem [resolvable:$true] %s19
      %22 = dma.hbm_to_vmem [thread:$0]  %s0, 128, %s20, [#allocation5]
    $region5: #{tpu_custom_call.1} parent=1 // pred_fallthru
      _
    // Predicated region
    $region6: #{tpu_custom_call.1} parent=1 // pred_check
      _
    $region7: #{tpu_custom_call.1} parent=1 // pred_check_branch
      %24 = sbr.rel (0) target = $region9
    $region8: #{tpu_custom_call.1} parent=1 // pred_region
      %s26 = ssub.s32 128, 128
      %27 = vsyncadd [#allocation8], %s26
      %s29 = sshll.u32 [#allocation7], 4
      %s30 = int_to_ptr.vmem [resolvable:$true] %s29
      %32 = dma.hbm_to_vmem [thread:$0]  %s1, 128, %s30, [#allocation8]
    $region9: #{tpu_custom_call.1} parent=1 // pred_fallthru
      _
    // Predicated region
    $region10: #{tpu_custom_call.1} parent=1 // pred_check
      _
    $region11: #{tpu_custom_call.1} parent=1 // pred_check_branch
      %34 = sbr.rel (0) target = $region13
    $region12: #{tpu_custom_call.1} parent=1 // pred_region
      %s36 = ssub.s32 128, 128
      %37 = vsyncadd [#allocation8], %s36
      %s39 = sshll.u32 [#allocation9], 4
      %s40 = int_to_ptr.vmem [resolvable:$true] %s39
      %42 = dma.hbm_to_vmem [thread:$0]  %s2, 128, %s40, [#allocation8]
    $region13: #{tpu_custom_call.1} parent=1 // pred_fallthru
      _
    // Predicated region
    $region14: #{tpu_custom_call.1} parent=1 // pred_check
      _
    $region15: #{tpu_custom_call.1} parent=1 // pred_check_branch
      %44 = sbr.rel (0) target = $region17
    $region16: #{tpu_custom_call.1} parent=1 // pred_region
      %s46 = ssub.s32 1024, 1024
      %47 = vsyncadd [#allocation11], %s46
      %s48 = sshll.u32 [#allocation10], 4
      %s49 = int_to_ptr.vmem [resolvable:$true] %s48
      %54 = dma.hbm_to_vmem [thread:$0]  %s3, 1024, %s49, [#allocation11], 128, 128, 8
    $region17: #{tpu_custom_call.1} parent=1 // pred_fallthru
      _
    // Predicated region
    $region18: #{tpu_custom_call.1} parent=1 // pred_check
      _
    $region19: #{tpu_custom_call.1} parent=1 // pred_check_branch
      %56 = sbr.rel (0) target = $region21
    $region20: #{tpu_custom_call.1} parent=1 // pred_region
      %57 = dma.done [#allocation5], 128
    $region21: #{tpu_custom_call.1} parent=1 // pred_fallthru
      _
    // Predicated region
    $region22: #{tpu_custom_call.1} parent=1 // pred_check
      _
    $region23: #{tpu_custom_call.1} parent=1 // pred_check_branch
      %59 = sbr.rel (0) target = $region25
    $region24: #{tpu_custom_call.1} parent=1 // pred_region
      %60 = dma.done [#allocation8], 128
    $region25: #{tpu_custom_call.1} parent=1 // pred_fallthru
      _
    // Predicated region
    $region26: #{tpu_custom_call.1} parent=1 // pred_check
      _
    $region27: #{tpu_custom_call.1} parent=1 // pred_check_branch
      %62 = sbr.rel (0) target = $region29
    $region28: #{tpu_custom_call.1} parent=1 // pred_region
      %63 = dma.done [#allocation8], 128
    $region29: #{tpu_custom_call.1} parent=1 // pred_fallthru
      _
    // Predicated region
    $region30: #{tpu_custom_call.1} parent=1 // pred_check
      _
    $region31: #{tpu_custom_call.1} parent=1 // pred_check_branch
      %65 = sbr.rel (0) target = $region33
    $region32: #{tpu_custom_call.1} parent=1 // pred_region
      %66 = dma.done [#allocation11], 1024
    $region33: #{tpu_custom_call.1} parent=1 // pred_fallthru
      _
    %p67 = scmp.eq.s32.totalorder 0, 0
    // Predicated region
    $region34: #{tpu_custom_call.1} parent=1 // pred_check
      %p68 = pneg %p67
    $region35: #{tpu_custom_call.1} parent=1 // pred_check_branch
      %70 = sbr.rel (%p68) target = $region37
    $region36: #{tpu_custom_call.1} parent=1 // pred_region
      %vm71 = vcmask 64512
      %72 = vst.msk [vmem:[#allocation3] sm:$0xff] %vm71, 0.0
      %73 = vst.msk [vmem:[#allocation3 + $0x8] sm:$0xff] %vm71, 0.0
      %74 = vst.msk [vmem:[#allocation3 + $0x10] sm:$0xff] %vm71, 0.0
      %75 = vst.msk [vmem:[#allocation3 + $0x18] sm:$0xff] %vm71, 0.0
      %76 = vst.msk [vmem:[#allocation3 + $0x20] sm:$0xff] %vm71, 0.0
      %77 = vst.msk [vmem:[#allocation3 + $0x28] sm:$0xff] %vm71, 0.0
      %78 = vst.msk [vmem:[#allocation3 + $0x30] sm:$0xff] %vm71, 0.0
      %79 = vst.msk [vmem:[#allocation3 + $0x38] sm:$0xff] %vm71, 0.0
      %80 = vst.msk [vmem:[#allocation3 + $0x40] sm:$0xff] %vm71, 0.0
      %81 = vst.msk [vmem:[#allocation3 + $0x48] sm:$0xff] %vm71, 0.0
      %82 = vst.msk [vmem:[#allocation3 + $0x50] sm:$0xff] %vm71, 0.0
      %83 = vst.msk [vmem:[#allocation3 + $0x58] sm:$0xff] %vm71, 0.0
      %84 = vst.msk [vmem:[#allocation3 + $0x60] sm:$0xff] %vm71, 0.0
      %85 = vst.msk [vmem:[#allocation3 + $0x68] sm:$0xff] %vm71, 0.0
      %86 = vst.msk [vmem:[#allocation3 + $0x70] sm:$0xff] %vm71, 0.0
      %87 = vst.msk [vmem:[#allocation3 + $0x78] sm:$0xff] %vm71, 0.0
    $region37: #{tpu_custom_call.1} parent=1 // pred_fallthru
      _
    %v88 = vld [vmem:[#allocation4] sm:$0xff]
    %v89 = vld [vmem:[#allocation7] sm:$0xff]
    %v90 = vld [vmem:[#allocation9] sm:$0xff]
    %v91 = vld [vmem:[#allocation10] sm:$0xff]
    %v92 = vld [vmem:[#allocation10 + $0x8] sm:$0xff]
    %v93 = vld [vmem:[#allocation10 + $0x10] sm:$0xff]
    %v94 = vld [vmem:[#allocation10 + $0x18] sm:$0xff]
    %v95 = vld [vmem:[#allocation10 + $0x20] sm:$0xff]
    %v96 = vld [vmem:[#allocation10 + $0x28] sm:$0xff]
    %v97 = vld [vmem:[#allocation10 + $0x30] sm:$0xff]
    %v98 = vld [vmem:[#allocation10 + $0x38] sm:$0xff]
    %v100 = vcombine.high %v90, %v90
    %v102 = vunpack.c.l.s4 1966171168
    %v103 = vunpack.c.0.s8 %v102
    %v104 = vlaneseq
    %v105 = vshrl.u32 %v104, 7
    %v106 = vsub.s32 %v103, %v105
    %v107 = vrot.slane %v90, %v106
    %v109 = vunpack.c.l.s4 1966171168
    %v110 = vunpack.c.0.s8 %v109
    %v111 = vlaneseq
    %v112 = vshrl.u32 %v111, 7
    %v113 = vsub.s32 %v110, %v112
    %v114 = vrot.slane %v100, %v113
    %v115 = vcombine.high %v107, %v107
    %v116 = vcombine.high %v114, %v114
    %v118 = vunpack.c.l.s4 1966171168
    %v119 = vunpack.c.0.s8 %v118
    %v120 = vlaneseq
    %v121 = vshrl.u32 %v120, 7
    %v122 = vsub.s32 %v119, %v121
    %v123 = vrot.slane %v107, %v122
    %v125 = vunpack.c.l.s4 1966171168
    %v126 = vunpack.c.0.s8 %v125
    %v127 = vlaneseq
    %v128 = vshrl.u32 %v127, 7
    %v129 = vsub.s32 %v126, %v128
    %v130 = vrot.slane %v114, %v129
    %v132 = vunpack.c.l.s4 1966171168
    %v133 = vunpack.c.0.s8 %v132
    %v134 = vlaneseq
    %v135 = vshrl.u32 %v134, 7
    %v136 = vsub.s32 %v133, %v135
    %v137 = vrot.slane %v115, %v136
    %v139 = vunpack.c.l.s4 1966171168
    %v140 = vunpack.c.0.s8 %v139
    %v141 = vlaneseq
    %v142 = vshrl.u32 %v141, 7
    %v143 = vsub.s32 %v140, %v142
    %v144 = vrot.slane %v116, %v143
    %v145 = vcombine.high %v123, %v123
    %v146 = vcombine.high %v130, %v130
    %v147 = vcombine.high %v137, %v137
    %v148 = vcombine.high %v144, %v144
    %v149 = vlaneseq
    %v150 = vshrl.u32 %v149, 7
    %v151 = vsub.s32 0, %v150
    %v152 = vrot.slane %v123, %v151
    %v153 = vlaneseq
    %v154 = vshrl.u32 %v153, 7
    %v155 = vsub.s32 0, %v154
    %v156 = vrot.slane %v137, %v155
    %v157 = vlaneseq
    %v158 = vshrl.u32 %v157, 7
    %v159 = vsub.s32 0, %v158
    %v160 = vrot.slane %v145, %v159
    %v161 = vlaneseq
    %v162 = vshrl.u32 %v161, 7
    %v163 = vsub.s32 0, %v162
    %v164 = vrot.slane %v147, %v163
    %v165 = vlaneseq
    %v166 = vshrl.u32 %v165, 7
    %v167 = vsub.s32 0, %v166
    %v168 = vrot.slane %v130, %v167
    %v169 = vlaneseq
    %v170 = vshrl.u32 %v169, 7
    %v171 = vsub.s32 0, %v170
    %v172 = vrot.slane %v144, %v171
    %v173 = vlaneseq
    %v174 = vshrl.u32 %v173, 7
    %v175 = vsub.s32 0, %v174
    %v176 = vrot.slane %v146, %v175
    %v177 = vlaneseq
    %v178 = vshrl.u32 %v177, 7
    %v179 = vsub.s32 0, %v178
    %v180 = vrot.slane %v148, %v179
    %v189 = vmul.f32 %v91, %v152
    %v190 = vmul.f32 %v92, %v156
    %v191 = vmul.f32 %v93, %v160
    %v192 = vmul.f32 %v94, %v164
    %v193 = vmul.f32 %v95, %v168
    %v194 = vmul.f32 %v96, %v172
    %v195 = vmul.f32 %v97, %v176
    %v196 = vmul.f32 %v98, %v180
    %v197 = vand.u32 2147483647, %v88
    %vm198 = vcmp.le.f32.partialorder %v197, 0.7853982
    %vm199 = vcmp.lt.s32.totalorder %v88, 0
    %v200 = vand.u32 %v88, 2139095040
    %v201 = vshrl.u32 %v200, 23
    %v202 = vsub.s32 %v201, 127
    %v203 = vand.u32 2147483647, %v88
    %v204 = vand.u32 %v203, 8388607
    %v205 = vor.u32 %v204, 8388608
    %v206 = vsub.s32 0, %v205
    %v207 = vadd.s32 %v202, 1
    %vm208 = vcmp.gt.s32.totalorder %v207, 0
    %v209 = vsel %vm208, %v207, 0
    %v210 = vshrl.u32 %v209, 5
    %v211 = vand.u32 %v209, 31
    %v212 = vsub.s32 32, %v211
    %v213 = vshrl.u32 683565275, %v212
    %v214 = vshll.u32 683565275, %v211
    %v215 = vshrl.u32 2475754826, %v212
    %v216 = vor.u32 %v214, %v215
    %v217 = vshll.u32 2475754826, %v211
    %v218 = vshrl.u32 2131351028, %v212
    %v219 = vor.u32 %v217, %v218
    %v220 = vshll.u32 2131351028, %v211
    %v221 = vshrl.u32 2102212464, %v212
    %v222 = vor.u32 %v220, %v221
    %v223 = vshll.u32 2102212464, %v211
    %v224 = vshrl.u32 920167782, %v212
    %v225 = vor.u32 %v223, %v224
    %v226 = vshll.u32 920167782, %v211
    %v227 = vshrl.u32 1326507024, %v212
    %v228 = vor.u32 %v226, %v227
    %vm229 = vcmp.lt.s32.totalorder %v210, 1
    %vm230 = vcmp.lt.s32.totalorder %v210, 2
    %vm231 = vcmp.lt.s32.totalorder %v210, 3
    %vm232 = vcmp.lt.s32.totalorder %v210, 4
    %v233 = vsel %vm229, %v213, %v216
    %v234 = vsel %vm232, %v222, 2102212464
    %v235 = vsel %vm231, %v219, %v234
    %v236 = vsel %vm230, %v233, %v235
    %v237 = vsel %vm229, %v216, %v219
    %v238 = vsel %vm232, %v225, 920167782
    %v239 = vsel %vm231, %v222, %v238
    %v240 = vsel %vm230, %v237, %v239
    %v241 = vsel %vm229, %v219, %v222
    %v242 = vsel %vm232, %v228, 1326507024
    %v243 = vsel %vm231, %v225, %v242
    %v244 = vsel %vm230, %v241, %v243
    %v245 = vshll.u32 %v205, 8
    %v246 = vmul.u32.u64.compose %v245, %v244
    %v247 = vextract.low.u32 %v246
    %v248 = vextract.high.u32 %v246
    %v249 = vmul.u32.u64.compose %v245, %v240
    %v250 = vextract.low.u32 %v249
    %v251 = vextract.high.u32 %v249
    %v252 = vmul.u32 %v245, %v236
    %v253 = vadd.s32 %v248, %v250
    %vm254 = vc.u32 %v248, %v250
    %v255 = vadd.s32 %v251, 1
    %v256 = vsel %vm254, %v255, %v251
    %v257 = vadd.s32 %v252, %v256
    %v258 = vadd.s32 %v257, 536870912
    %v259 = vshrl.u32 %v258, 30
    %v260 = vshll.u32 %v259, 30
    %v261 = vsub.s32 %v257, %v260
    %vm262 = vcmp.lt.s32.totalorder %v261, 0
    %v263 = vsub.s32 0, %v261
    %v264 = vsel %vm262, %v263, %v261
    %v265 = vclz %v264
    %v266 = vsub.s32 %v265, 2
    %vm267 = vcmp.gt.s32.totalorder 0, %v266
    %v268 = vsel %vm267, 0, %v266
    %v269 = vsub.s32 32, %v268
    %v270 = vshll.u32 %v261, %v268
    %v271 = vshrl.u32 %v253, %v269
    %v272 = vor.u32 %v270, %v271
    %v273 = vsub.s32 4294967266, %v268
    %v274 = vadd.s32 %v273, 127
    %v275 = vshll.u32 %v274, 23
    %v276 = vor.u32 4788187, %v275
    %v277 = vand.u32 2147483647, %v276
    %v279 = vcvt.s32.f32 %v272
    %v280 = vmul.f32 %v279, %v277
    %v281 = vxor.u32 %v280, 2147483648
    %v282 = vsel %vm199, %v281, %v280
    %v283 = vsub.s32 4, %v259
    %v284 = vsel %vm199, %v283, %v259
    %v285 = vsel %vm198, %v88, %v282
    %v286 = vsel %vm198, 0, %v284
    %v287 = vcosq.f32.pop %v285
    %v288 = vsinq.f32.pop %v285
    %vm289 = vweird.f32 %v88
    %v290 = vand.u32 %v286, 3
    %vm291 = vcmp.lt.s32.totalorder %v290, 2
    %vm292 = vcmp.eq.s32.totalorder %v290, 0
    %v293 = vxor.u32 %v288, 2147483648
    %v294 = vsel %vm292, %v287, %v293
    %vm295 = vcmp.eq.s32.totalorder %v290, 2
    %v296 = vxor.u32 %v287, 2147483648
    %v297 = vsel %vm295, %v296, %v288
    %v298 = vsel %vm291, %v294, %v297
    %v299 = vsel %vm289, nan, %v298
    %v300 = vand.u32 2147483647, %v88
    %vm301 = vcmp.le.f32.partialorder %v300, 0.7853982
    %vm302 = vcmp.lt.s32.totalorder %v88, 0
    %v303 = vand.u32 %v88, 2139095040
    %v304 = vshrl.u32 %v303, 23
    %v305 = vsub.s32 %v304, 127
    %v306 = vand.u32 2147483647, %v88
    %v307 = vand.u32 %v306, 8388607
    %v308 = vor.u32 %v307, 8388608
    %v309 = vsub.s32 0, %v308
    %v310 = vadd.s32 %v305, 1
    %vm311 = vcmp.gt.s32.totalorder %v310, 0
    %v312 = vsel %vm311, %v310, 0
    %v313 = vshrl.u32 %v312, 5
    %v314 = vand.u32 %v312, 31
    %v315 = vsub.s32 32, %v314
    %v316 = vshrl.u32 683565275, %v315
    %v317 = vshll.u32 683565275, %v314
    %v318 = vshrl.u32 2475754826, %v315
    %v319 = vor.u32 %v317, %v318
    %v320 = vshll.u32 2475754826, %v314
    %v321 = vshrl.u32 2131351028, %v315
    %v322 = vor.u32 %v320, %v321
    %v323 = vshll.u32 2131351028, %v314
    %v324 = vshrl.u32 2102212464, %v315
    %v325 = vor.u32 %v323, %v324
    %v326 = vshll.u32 2102212464, %v314
    %v327 = vshrl.u32 920167782, %v315
    %v328 = vor.u32 %v326, %v327
    %v329 = vshll.u32 920167782, %v314
    %v330 = vshrl.u32 1326507024, %v315
    %v331 = vor.u32 %v329, %v330
    %vm332 = vcmp.lt.s32.totalorder %v313, 1
    %vm333 = vcmp.lt.s32.totalorder %v313, 2
    %vm334 = vcmp.lt.s32.totalorder %v313, 3
    %vm335 = vcmp.lt.s32.totalorder %v313, 4
    %v336 = vsel %vm332, %v316, %v319
    %v337 = vsel %vm335, %v325, 2102212464
    %v338 = vsel %vm334, %v322, %v337
    %v339 = vsel %vm333, %v336, %v338
    %v340 = vsel %vm332, %v319, %v322
    %v341 = vsel %vm335, %v328, 920167782
    %v342 = vsel %vm334, %v325, %v341
    %v343 = vsel %vm333, %v340, %v342
    %v344 = vsel %vm332, %v322, %v325
    %v345 = vsel %vm335, %v331, 1326507024
    %v346 = vsel %vm334, %v328, %v345
    %v347 = vsel %vm333, %v344, %v346
    %v348 = vshll.u32 %v308, 8
    %v349 = vmul.u32.u64.compose %v348, %v347
    %v350 = vextract.low.u32 %v349
    %v351 = vextract.high.u32 %v349
    %v352 = vmul.u32.u64.compose %v348, %v343
    %v353 = vextract.low.u32 %v352
    %v354 = vextract.high.u32 %v352
    %v355 = vmul.u32 %v348, %v339
    %v356 = vadd.s32 %v351, %v353
    %vm357 = vc.u32 %v351, %v353
    %v358 = vadd.s32 %v354, 1
    %v359 = vsel %vm357, %v358, %v354
    %v360 = vadd.s32 %v355, %v359
    %v361 = vadd.s32 %v360, 536870912
    %v362 = vshrl.u32 %v361, 30
    %v363 = vshll.u32 %v362, 30
    %v364 = vsub.s32 %v360, %v363
    %vm365 = vcmp.lt.s32.totalorder %v364, 0
    %v366 = vsub.s32 0, %v364
    %v367 = vsel %vm365, %v366, %v364
    %v368 = vclz %v367
    %v369 = vsub.s32 %v368, 2
    %vm370 = vcmp.gt.s32.totalorder 0, %v369
    %v371 = vsel %vm370, 0, %v369
    %v372 = vsub.s32 32, %v371
    %v373 = vshll.u32 %v364, %v371
    %v374 = vshrl.u32 %v356, %v372
    %v375 = vor.u32 %v373, %v374
    %v376 = vsub.s32 4294967266, %v371
    %v377 = vadd.s32 %v376, 127
    %v378 = vshll.u32 %v377, 23
    %v379 = vor.u32 4788187, %v378
    %v380 = vand.u32 2147483647, %v379
    %v382 = vcvt.s32.f32 %v375
    %v383 = vmul.f32 %v382, %v380
    %v384 = vxor.u32 %v383, 2147483648
    %v385 = vsel %vm302, %v384, %v383
    %v386 = vsub.s32 4, %v362
    %v387 = vsel %vm302, %v386, %v362
    %v388 = vsel %vm301, %v88, %v385
    %v389 = vsel %vm301, 0, %v387
    %v390 = vcosq.f32.pop %v388
    %v391 = vsinq.f32.pop %v388
    %vm392 = vweird.f32 %v88
    %v393 = vadd.s32 %v389, 3
    %v394 = vand.u32 %v393, 3
    %vm395 = vcmp.lt.s32.totalorder %v394, 2
    %vm396 = vcmp.eq.s32.totalorder %v394, 0
    %v397 = vxor.u32 %v391, 2147483648
    %v398 = vsel %vm396, %v390, %v397
    %vm399 = vcmp.eq.s32.totalorder %v394, 2
    %v400 = vxor.u32 %v390, 2147483648
    %v401 = vsel %vm399, %v400, %v391
    %v402 = vsel %vm395, %v398, %v401
    %v403 = vsel %vm392, nan, %v402
    %v404 = vand.u32 2147483647, %v89
    %vm405 = vcmp.le.f32.partialorder %v404, 0.7853982
    %vm406 = vcmp.lt.s32.totalorder %v89, 0
    %v407 = vand.u32 %v89, 2139095040
    %v408 = vshrl.u32 %v407, 23
    %v409 = vsub.s32 %v408, 127
    %v410 = vand.u32 2147483647, %v89
    %v411 = vand.u32 %v410, 8388607
    %v412 = vor.u32 %v411, 8388608
    %v413 = vsub.s32 0, %v412
    %v414 = vadd.s32 %v409, 1
    %vm415 = vcmp.gt.s32.totalorder %v414, 0
    %v416 = vsel %vm415, %v414, 0
    %v417 = vshrl.u32 %v416, 5
    %v418 = vand.u32 %v416, 31
    %v419 = vsub.s32 32, %v418
    %v420 = vshrl.u32 683565275, %v419
    %v421 = vshll.u32 683565275, %v418
    %v422 = vshrl.u32 2475754826, %v419
    %v423 = vor.u32 %v421, %v422
    %v424 = vshll.u32 2475754826, %v418
    %v425 = vshrl.u32 2131351028, %v419
    %v426 = vor.u32 %v424, %v425
    %v427 = vshll.u32 2131351028, %v418
    %v428 = vshrl.u32 2102212464, %v419
    %v429 = vor.u32 %v427, %v428
    %v430 = vshll.u32 2102212464, %v418
    %v431 = vshrl.u32 920167782, %v419
    %v432 = vor.u32 %v430, %v431
    %v433 = vshll.u32 920167782, %v418
    %v434 = vshrl.u32 1326507024, %v419
    %v435 = vor.u32 %v433, %v434
    %vm436 = vcmp.lt.s32.totalorder %v417, 1
    %vm437 = vcmp.lt.s32.totalorder %v417, 2
    %vm438 = vcmp.lt.s32.totalorder %v417, 3
    %vm439 = vcmp.lt.s32.totalorder %v417, 4
    %v440 = vsel %vm436, %v420, %v423
    %v441 = vsel %vm439, %v429, 2102212464
    %v442 = vsel %vm438, %v426, %v441
    %v443 = vsel %vm437, %v440, %v442
    %v444 = vsel %vm436, %v423, %v426
    %v445 = vsel %vm439, %v432, 920167782
    %v446 = vsel %vm438, %v429, %v445
    %v447 = vsel %vm437, %v444, %v446
    %v448 = vsel %vm436, %v426, %v429
    %v449 = vsel %vm439, %v435, 1326507024
    %v450 = vsel %vm438, %v432, %v449
    %v451 = vsel %vm437, %v448, %v450
    %v452 = vshll.u32 %v412, 8
    %v453 = vmul.u32.u64.compose %v452, %v451
    %v454 = vextract.low.u32 %v453
    %v455 = vextract.high.u32 %v453
    %v456 = vmul.u32.u64.compose %v452, %v447
    %v457 = vextract.low.u32 %v456
    %v458 = vextract.high.u32 %v456
    %v459 = vmul.u32 %v452, %v443
    %v460 = vadd.s32 %v455, %v457
    %vm461 = vc.u32 %v455, %v457
    %v462 = vadd.s32 %v458, 1
    %v463 = vsel %vm461, %v462, %v458
    %v464 = vadd.s32 %v459, %v463
    %v465 = vadd.s32 %v464, 536870912
    %v466 = vshrl.u32 %v465, 30
    %v467 = vshll.u32 %v466, 30
    %v468 = vsub.s32 %v464, %v467
    %vm469 = vcmp.lt.s32.totalorder %v468, 0
    %v470 = vsub.s32 0, %v468
    %v471 = vsel %vm469, %v470, %v468
    %v472 = vclz %v471
    %v473 = vsub.s32 %v472, 2
    %vm474 = vcmp.gt.s32.totalorder 0, %v473
    %v475 = vsel %vm474, 0, %v473
    %v476 = vsub.s32 32, %v475
    %v477 = vshll.u32 %v468, %v475
    %v478 = vshrl.u32 %v460, %v476
    %v479 = vor.u32 %v477, %v478
    %v480 = vsub.s32 4294967266, %v475
    %v481 = vadd.s32 %v480, 127
    %v482 = vshll.u32 %v481, 23
    %v483 = vor.u32 4788187, %v482
    %v484 = vand.u32 2147483647, %v483
    %v486 = vcvt.s32.f32 %v479
    %v487 = vmul.f32 %v486, %v484
    %v488 = vxor.u32 %v487, 2147483648
    %v489 = vsel %vm406, %v488, %v487
    %v490 = vsub.s32 4, %v466
    %v491 = vsel %vm406, %v490, %v466
    %v492 = vsel %vm405, %v89, %v489
    %v493 = vsel %vm405, 0, %v491
    %v494 = vcosq.f32.pop %v492
    %v495 = vsinq.f32.pop %v492
    %vm496 = vweird.f32 %v89
    %v497 = vand.u32 %v493, 3
    %vm498 = vcmp.lt.s32.totalorder %v497, 2
    %vm499 = vcmp.eq.s32.totalorder %v497, 0
    %v500 = vxor.u32 %v495, 2147483648
    %v501 = vsel %vm499, %v494, %v500
    %vm502 = vcmp.eq.s32.totalorder %v497, 2
    %v503 = vxor.u32 %v494, 2147483648
    %v504 = vsel %vm502, %v503, %v495
    %v505 = vsel %vm498, %v501, %v504
    %v506 = vsel %vm496, nan, %v505
    %v507 = vand.u32 2147483647, %v89
    %vm508 = vcmp.le.f32.partialorder %v507, 0.7853982
    %vm509 = vcmp.lt.s32.totalorder %v89, 0
    %v510 = vand.u32 %v89, 2139095040
    %v511 = vshrl.u32 %v510, 23
    %v512 = vsub.s32 %v511, 127
    %v513 = vand.u32 2147483647, %v89
    %v514 = vand.u32 %v513, 8388607
    %v515 = vor.u32 %v514, 8388608
    %v516 = vsub.s32 0, %v515
    %v517 = vadd.s32 %v512, 1
    %vm518 = vcmp.gt.s32.totalorder %v517, 0
    %v519 = vsel %vm518, %v517, 0
    %v520 = vshrl.u32 %v519, 5
    %v521 = vand.u32 %v519, 31
    %v522 = vsub.s32 32, %v521
    %v523 = vshrl.u32 683565275, %v522
    %v524 = vshll.u32 683565275, %v521
    %v525 = vshrl.u32 2475754826, %v522
    %v526 = vor.u32 %v524, %v525
    %v527 = vshll.u32 2475754826, %v521
    %v528 = vshrl.u32 2131351028, %v522
    %v529 = vor.u32 %v527, %v528
    %v530 = vshll.u32 2131351028, %v521
    %v531 = vshrl.u32 2102212464, %v522
    %v532 = vor.u32 %v530, %v531
    %v533 = vshll.u32 2102212464, %v521
    %v534 = vshrl.u32 920167782, %v522
    %v535 = vor.u32 %v533, %v534
    %v536 = vshll.u32 920167782, %v521
    %v537 = vshrl.u32 1326507024, %v522
    %v538 = vor.u32 %v536, %v537
    %vm539 = vcmp.lt.s32.totalorder %v520, 1
    %vm540 = vcmp.lt.s32.totalorder %v520, 2
    %vm541 = vcmp.lt.s32.totalorder %v520, 3
    %vm542 = vcmp.lt.s32.totalorder %v520, 4
    %v543 = vsel %vm539, %v523, %v526
    %v544 = vsel %vm542, %v532, 2102212464
    %v545 = vsel %vm541, %v529, %v544
    %v546 = vsel %vm540, %v543, %v545
    %v547 = vsel %vm539, %v526, %v529
    %v548 = vsel %vm542, %v535, 920167782
    %v549 = vsel %vm541, %v532, %v548
    %v550 = vsel %vm540, %v547, %v549
    %v551 = vsel %vm539, %v529, %v532
    %v552 = vsel %vm542, %v538, 1326507024
    %v553 = vsel %vm541, %v535, %v552
    %v554 = vsel %vm540, %v551, %v553
    %v555 = vshll.u32 %v515, 8
    %v556 = vmul.u32.u64.compose %v555, %v554
    %v557 = vextract.low.u32 %v556
    %v558 = vextract.high.u32 %v556
    %v559 = vmul.u32.u64.compose %v555, %v550
    %v560 = vextract.low.u32 %v559
    %v561 = vextract.high.u32 %v559
    %v562 = vmul.u32 %v555, %v546
    %v563 = vadd.s32 %v558, %v560
    %vm564 = vc.u32 %v558, %v560
    %v565 = vadd.s32 %v561, 1
    %v566 = vsel %vm564, %v565, %v561
    %v567 = vadd.s32 %v562, %v566
    %v568 = vadd.s32 %v567, 536870912
    %v569 = vshrl.u32 %v568, 30
    %v570 = vshll.u32 %v569, 30
    %v571 = vsub.s32 %v567, %v570
    %vm572 = vcmp.lt.s32.totalorder %v571, 0
    %v573 = vsub.s32 0, %v571
    %v574 = vsel %vm572, %v573, %v571
    %v575 = vclz %v574
    %v576 = vsub.s32 %v575, 2
    %vm577 = vcmp.gt.s32.totalorder 0, %v576
    %v578 = vsel %vm577, 0, %v576
    %v579 = vsub.s32 32, %v578
    %v580 = vshll.u32 %v571, %v578
    %v581 = vshrl.u32 %v563, %v579
    %v582 = vor.u32 %v580, %v581
    %v583 = vsub.s32 4294967266, %v578
    %v584 = vadd.s32 %v583, 127
    %v585 = vshll.u32 %v584, 23
    %v586 = vor.u32 4788187, %v585
    %v587 = vand.u32 2147483647, %v586
    %v589 = vcvt.s32.f32 %v582
    %v590 = vmul.f32 %v589, %v587
    %v591 = vxor.u32 %v590, 2147483648
    %v592 = vsel %vm509, %v591, %v590
    %v593 = vsub.s32 4, %v569
    %v594 = vsel %vm509, %v593, %v569
    %v595 = vsel %vm508, %v89, %v592
    %v596 = vsel %vm508, 0, %v594
    %v597 = vcosq.f32.pop %v595
    %v598 = vsinq.f32.pop %v595
    %vm599 = vweird.f32 %v89
    %v600 = vadd.s32 %v596, 3
    %v601 = vand.u32 %v600, 3
    %vm602 = vcmp.lt.s32.totalorder %v601, 2
    %vm603 = vcmp.eq.s32.totalorder %v601, 0
    %v604 = vxor.u32 %v598, 2147483648
    %v605 = vsel %vm603, %v597, %v604
    %vm606 = vcmp.eq.s32.totalorder %v601, 2
    %v607 = vxor.u32 %v597, 2147483648
    %v608 = vsel %vm606, %v607, %v598
    %v609 = vsel %vm602, %v605, %v608
    %v610 = vsel %vm599, nan, %v609
    %v611 = vmul.f32 %v506, %v506
    %v612 = vmul.f32 %v610, %v610
    %v613 = vsub.f32 %v611, %v612
    %v614 = vmul.f32 %v610, %v506
    %v615 = vadd.f32 %v614, %v614
    %v616 = vmul.f32 %v613, %v506
    %v617 = vmul.f32 %v615, %v610
    %v618 = vsub.f32 %v616, %v617
    %v619 = vmul.f32 %v615, %v506
    %v620 = vmul.f32 %v613, %v610
    %v621 = vadd.f32 %v619, %v620
    %622 = vst [vmem:[#allocation2] sm:$0xff] 0.2820948
    %v623 = vmul.f32 %v403, -1.0
    %v624 = vmul.f32 %v299, 0.48860252
    %s625 = scalar_lea.vmem [#allocation2], 8
    %626 = vst [vmem:[%s625] sm:$0xff] %v624
    %v627 = vmul.f32 %v623, -0.34549415
    %v628 = vmul.f32 %v627, %v506
    %s629 = scalar_lea.vmem [#allocation2], 16
    %630 = vst [vmem:[%s629] sm:$0xff] %v628
    %v631 = vsub.f32 0.0, %v627
    %v632 = vmul.f32 %v631, %v610
    %s633 = scalar_lea.vmem [#allocation2], 24
    %634 = vst [vmem:[%s633] sm:$0xff] %v632
    %v635 = vmul.f32 %v403, -3.0
    %v636 = vmul.f32 %v635, %v623
    %v637 = vmul.f32 %v299, 3.0
    %v638 = vmul.f32 %v637, %v623
    %v639 = vmul.f32 %v637, %v299
    %v640 = vsub.f32 %v639, 1.0
    %v641 = vrcp.pop 2.0
    %v642 = vmul.f32 %v640, %v641
    %v643 = vmul.f32 %v642, 0.63078314
    %s644 = scalar_lea.vmem [#allocation2], 32
    %645 = vst [vmem:[%s644] sm:$0xff] %v643
    %v646 = vmul.f32 %v638, -0.25751615
    %v647 = vmul.f32 %v646, %v506
    %s648 = scalar_lea.vmem [#allocation2], 40
    %649 = vst [vmem:[%s648] sm:$0xff] %v647
    %v650 = vsub.f32 0.0, %v646
    %v651 = vmul.f32 %v650, %v610
    %s652 = scalar_lea.vmem [#allocation2], 48
    %653 = vst [vmem:[%s652] sm:$0xff] %v651
    %v654 = vmul.f32 %v636, 0.12875807
    %v655 = vmul.f32 %v654, %v613
    %s656 = scalar_lea.vmem [#allocation2], 56
    %657 = vst [vmem:[%s656] sm:$0xff] %v655
    %v658 = vsub.f32 0.0, %v654
    %v659 = vmul.f32 %v658, %v615
    %s660 = scalar_lea.vmem [#allocation2], 64
    %661 = vst [vmem:[%s660] sm:$0xff] %v659
    %v662 = vmul.f32 %v403, -5.0
    %v663 = vmul.f32 %v662, %v636
    %v664 = vmul.f32 %v299, 5.0
    %v665 = vmul.f32 %v664, %v636
    %v666 = vmul.f32 %v664, %v638
    %v667 = vmul.f32 %v623, 3.0
    %v668 = vsub.f32 %v666, %v667
    %v669 = vmul.f32 %v668, %v641
    %v670 = vmul.f32 %v664, %v642
    %v671 = vmul.f32 %v299, 2.0
    %v672 = vsub.f32 %v670, %v671
    %v673 = vrcp.pop 3.0
    %v674 = vmul.f32 %v672, %v673
    %v675 = vmul.f32 %v674, 0.7463527
    %s676 = scalar_lea.vmem [#allocation2], 72
    %677 = vst [vmem:[%s676] sm:$0xff] %v675
    %v678 = vmul.f32 %v669, -0.21545346
    %v679 = vmul.f32 %v678, %v506
    %s680 = scalar_lea.vmem [#allocation2], 80
    %681 = vst [vmem:[%s680] sm:$0xff] %v679
    %v682 = vsub.f32 0.0, %v678
    %v683 = vmul.f32 %v682, %v610
    %s684 = scalar_lea.vmem [#allocation2], 88
    %685 = vst [vmem:[%s684] sm:$0xff] %v683
    %v686 = vmul.f32 %v665, 0.06813236
    %v687 = vmul.f32 %v686, %v613
    %s688 = scalar_lea.vmem [#allocation2], 96
    %689 = vst [vmem:[%s688] sm:$0xff] %v687
    %v690 = vsub.f32 0.0, %v686
    %v691 = vmul.f32 %v690, %v615
    %s692 = scalar_lea.vmem [#allocation2], 104
    %693 = vst [vmem:[%s692] sm:$0xff] %v691
    %v694 = vmul.f32 %v663, -0.027814921
    %v695 = vmul.f32 %v694, %v618
    %s696 = scalar_lea.vmem [#allocation2], 112
    %697 = vst [vmem:[%s696] sm:$0xff] %v695
    %v698 = vsub.f32 0.0, %v694
    %v699 = vmul.f32 %v698, %v621
    %s700 = scalar_lea.vmem [#allocation2], 120
    %701 = vst [vmem:[%s700] sm:$0xff] %v699
    %v702 = vld [vmem:[#allocation3] sm:$0xff]
    %v703 = vld [vmem:[#allocation3 + $0x8] sm:$0xff]
    %v704 = vld [vmem:[#allocation3 + $0x10] sm:$0xff]
    %v705 = vld [vmem:[#allocation3 + $0x18] sm:$0xff]
    %v706 = vld [vmem:[#allocation3 + $0x20] sm:$0xff]
    %v707 = vld [vmem:[#allocation3 + $0x28] sm:$0xff]
    %v708 = vld [vmem:[#allocation3 + $0x30] sm:$0xff]
    %v709 = vld [vmem:[#allocation3 + $0x38] sm:$0xff]
    %v710 = vld [vmem:[#allocation3 + $0x40] sm:$0xff]
    %v711 = vld [vmem:[#allocation3 + $0x48] sm:$0xff]
    %v712 = vld [vmem:[#allocation3 + $0x50] sm:$0xff]
    %v713 = vld [vmem:[#allocation3 + $0x58] sm:$0xff]
    %v714 = vld [vmem:[#allocation3 + $0x60] sm:$0xff]
    %v715 = vld [vmem:[#allocation3 + $0x68] sm:$0xff]
    %v716 = vld [vmem:[#allocation3 + $0x70] sm:$0xff]
    %v717 = vld [vmem:[#allocation3 + $0x78] sm:$0xff]
    %v718 = vld [vmem:[#allocation2] sm:$0xff]
    %v719 = vld [vmem:[#allocation2 + $0x8] sm:$0xff]
    %v720 = vld [vmem:[#allocation2 + $0x10] sm:$0xff]
    %v721 = vld [vmem:[#allocation2 + $0x18] sm:$0xff]
    %v722 = vld [vmem:[#allocation2 + $0x20] sm:$0xff]
    %v723 = vld [vmem:[#allocation2 + $0x28] sm:$0xff]
    %v724 = vld [vmem:[#allocation2 + $0x30] sm:$0xff]
    %v725 = vld [vmem:[#allocation2 + $0x38] sm:$0xff]
    %v726 = vld [vmem:[#allocation2 + $0x40] sm:$0xff]
    %v727 = vld [vmem:[#allocation2 + $0x48] sm:$0xff]
    %v728 = vld [vmem:[#allocation2 + $0x50] sm:$0xff]
    %v729 = vld [vmem:[#allocation2 + $0x58] sm:$0xff]
    %v730 = vld [vmem:[#allocation2 + $0x60] sm:$0xff]
    %v731 = vld [vmem:[#allocation2 + $0x68] sm:$0xff]
    %v732 = vld [vmem:[#allocation2 + $0x70] sm:$0xff]
    %v733 = vld [vmem:[#allocation2 + $0x78] sm:$0xff]
    %v734 = vcombine.low %v718, %v720
    %v735 = vcombine.high %v718, %v720
    %v737 = vunpack.c.l.s4 1983009808
    %v738 = vunpack.c.0.s8 %v737
    %v739 = vlaneseq
    %v740 = vshrl.u32 %v739, 7
    %v741 = vsub.s32 %v738, %v740
    %v742 = vrot.slane %v734, %v741
    %v744 = vunpack.c.l.s4 1983009808
    %v745 = vunpack.c.0.s8 %v744
    %v746 = vlaneseq
    %v747 = vshrl.u32 %v746, 7
    %v748 = vsub.s32 %v745, %v747
    %v749 = vrot.slane %v735, %v748
    %v750 = vcombine.low %v719, %v721
    %v751 = vcombine.high %v719, %v721
    %v753 = vunpack.c.l.s4 1983009808
    %v754 = vunpack.c.0.s8 %v753
    %v755 = vlaneseq
    %v756 = vshrl.u32 %v755, 7
    %v757 = vsub.s32 %v754, %v756
    %v758 = vrot.slane %v750, %v757
    %v760 = vunpack.c.l.s4 1983009808
    %v761 = vunpack.c.0.s8 %v760
    %v762 = vlaneseq
    %v763 = vshrl.u32 %v762, 7
    %v764 = vsub.s32 %v761, %v763
    %v765 = vrot.slane %v751, %v764
    %v766 = vcombine.low %v722, %v724
    %v767 = vcombine.high %v722, %v724
    %v769 = vunpack.c.l.s4 1983009808
    %v770 = vunpack.c.0.s8 %v769
    %v771 = vlaneseq
    %v772 = vshrl.u32 %v771, 7
    %v773 = vsub.s32 %v770, %v772
    %v774 = vrot.slane %v766, %v773
    %v776 = vunpack.c.l.s4 1983009808
    %v777 = vunpack.c.0.s8 %v776
    %v778 = vlaneseq
    %v779 = vshrl.u32 %v778, 7
    %v780 = vsub.s32 %v777, %v779
    %v781 = vrot.slane %v767, %v780
    %v782 = vcombine.low %v723, %v725
    %v783 = vcombine.high %v723, %v725
    %v785 = vunpack.c.l.s4 1983009808
    %v786 = vunpack.c.0.s8 %v785
    %v787 = vlaneseq
    %v788 = vshrl.u32 %v787, 7
    %v789 = vsub.s32 %v786, %v788
    %v790 = vrot.slane %v782, %v789
    %v792 = vunpack.c.l.s4 1983009808
    %v793 = vunpack.c.0.s8 %v792
    %v794 = vlaneseq
    %v795 = vshrl.u32 %v794, 7
    %v796 = vsub.s32 %v793, %v795
    %v797 = vrot.slane %v783, %v796
    %v798 = vcombine.low %v742, %v758
    %v799 = vcombine.high %v742, %v758
    %v801 = vunpack.c.l.s4 1934713408
    %v802 = vunpack.c.0.s8 %v801
    %v803 = vlaneseq
    %v804 = vshrl.u32 %v803, 7
    %v805 = vsub.s32 %v802, %v804
    %v806 = vrot.slane %v798, %v805
    %v808 = vunpack.c.l.s4 1934713408
    %v809 = vunpack.c.0.s8 %v808
    %v810 = vlaneseq
    %v811 = vshrl.u32 %v810, 7
    %v812 = vsub.s32 %v809, %v811
    %v813 = vrot.slane %v799, %v812
    %v814 = vcombine.low %v749, %v765
    %v815 = vcombine.high %v749, %v765
    %v817 = vunpack.c.l.s4 1934713408
    %v818 = vunpack.c.0.s8 %v817
    %v819 = vlaneseq
    %v820 = vshrl.u32 %v819, 7
    %v821 = vsub.s32 %v818, %v820
    %v822 = vrot.slane %v814, %v821
    %v824 = vunpack.c.l.s4 1934713408
    %v825 = vunpack.c.0.s8 %v824
    %v826 = vlaneseq
    %v827 = vshrl.u32 %v826, 7
    %v828 = vsub.s32 %v825, %v827
    %v829 = vrot.slane %v815, %v828
    %v830 = vcombine.low %v774, %v790
    %v831 = vcombine.high %v774, %v790
    %v833 = vunpack.c.l.s4 1934713408
    %v834 = vunpack.c.0.s8 %v833
    %v835 = vlaneseq
    %v836 = vshrl.u32 %v835, 7
    %v837 = vsub.s32 %v834, %v836
    %v838 = vrot.slane %v830, %v837
    %v840 = vunpack.c.l.s4 1934713408
    %v841 = vunpack.c.0.s8 %v840
    %v842 = vlaneseq
    %v843 = vshrl.u32 %v842, 7
    %v844 = vsub.s32 %v841, %v843
    %v845 = vrot.slane %v831, %v844
    %v846 = vcombine.low %v781, %v797
    %v847 = vcombine.high %v781, %v797
    %v849 = vunpack.c.l.s4 1934713408
    %v850 = vunpack.c.0.s8 %v849
    %v851 = vlaneseq
    %v852 = vshrl.u32 %v851, 7
    %v853 = vsub.s32 %v850, %v852
    %v854 = vrot.slane %v846, %v853
    %v856 = vunpack.c.l.s4 1934713408
    %v857 = vunpack.c.0.s8 %v856
    %v858 = vlaneseq
    %v859 = vshrl.u32 %v858, 7
    %v860 = vsub.s32 %v857, %v859
    %v861 = vrot.slane %v847, %v860
    %v862 = vcombine.low %v806, %v838
    %v863 = vcombine.high %v806, %v838
    %v864 = vcombine.low %v813, %v845
    %v865 = vcombine.high %v813, %v845
    %v866 = vcombine.low %v822, %v854
    %v867 = vcombine.high %v822, %v854
    %v868 = vcombine.low %v829, %v861
    %v869 = vcombine.high %v829, %v861
    %v870 = vcombine.low %v726, %v728
    %v871 = vcombine.high %v726, %v728
    %v873 = vunpack.c.l.s4 1983009808
    %v874 = vunpack.c.0.s8 %v873
    %v875 = vlaneseq
    %v876 = vshrl.u32 %v875, 7
    %v877 = vsub.s32 %v874, %v876
    %v878 = vrot.slane %v870, %v877
    %v880 = vunpack.c.l.s4 1983009808
    %v881 = vunpack.c.0.s8 %v880
    %v882 = vlaneseq
    %v883 = vshrl.u32 %v882, 7
    %v884 = vsub.s32 %v881, %v883
    %v885 = vrot.slane %v871, %v884
    %v886 = vcombine.low %v727, %v729
    %v887 = vcombine.high %v727, %v729
    %v889 = vunpack.c.l.s4 1983009808
    %v890 = vunpack.c.0.s8 %v889
    %v891 = vlaneseq
    %v892 = vshrl.u32 %v891, 7
    %v893 = vsub.s32 %v890, %v892
    %v894 = vrot.slane %v886, %v893
    %v896 = vunpack.c.l.s4 1983009808
    %v897 = vunpack.c.0.s8 %v896
    %v898 = vlaneseq
    %v899 = vshrl.u32 %v898, 7
    %v900 = vsub.s32 %v897, %v899
    %v901 = vrot.slane %v887, %v900
    %v902 = vcombine.low %v730, %v732
    %v903 = vcombine.high %v730, %v732
    %v905 = vunpack.c.l.s4 1983009808
    %v906 = vunpack.c.0.s8 %v905
    %v907 = vlaneseq
    %v908 = vshrl.u32 %v907, 7
    %v909 = vsub.s32 %v906, %v908
    %v910 = vrot.slane %v902, %v909
    %v912 = vunpack.c.l.s4 1983009808
    %v913 = vunpack.c.0.s8 %v912
    %v914 = vlaneseq
    %v915 = vshrl.u32 %v914, 7
    %v916 = vsub.s32 %v913, %v915
    %v917 = vrot.slane %v903, %v916
    %v918 = vcombine.low %v731, %v733
    %v919 = vcombine.high %v731, %v733
    %v921 = vunpack.c.l.s4 1983009808
    %v922 = vunpack.c.0.s8 %v921
    %v923 = vlaneseq
    %v924 = vshrl.u32 %v923, 7
    %v925 = vsub.s32 %v922, %v924
    %v926 = vrot.slane %v918, %v925
    %v928 = vunpack.c.l.s4 1983009808
    %v929 = vunpack.c.0.s8 %v928
    %v930 = vlaneseq
    %v931 = vshrl.u32 %v930, 7
    %v932 = vsub.s32 %v929, %v931
    %v933 = vrot.slane %v919, %v932
    %v934 = vcombine.low %v878, %v894
    %v935 = vcombine.high %v878, %v894
    %v937 = vunpack.c.l.s4 1934713408
    %v938 = vunpack.c.0.s8 %v937
    %v939 = vlaneseq
    %v940 = vshrl.u32 %v939, 7
    %v941 = vsub.s32 %v938, %v940
    %v942 = vrot.slane %v934, %v941
    %v944 = vunpack.c.l.s4 1934713408
    %v945 = vunpack.c.0.s8 %v944
    %v946 = vlaneseq
    %v947 = vshrl.u32 %v946, 7
    %v948 = vsub.s32 %v945, %v947
    %v949 = vrot.slane %v935, %v948
    %v950 = vcombine.low %v885, %v901
    %v951 = vcombine.high %v885, %v901
    %v953 = vunpack.c.l.s4 1934713408
    %v954 = vunpack.c.0.s8 %v953
    %v955 = vlaneseq
    %v956 = vshrl.u32 %v955, 7
    %v957 = vsub.s32 %v954, %v956
    %v958 = vrot.slane %v950, %v957
    %v960 = vunpack.c.l.s4 1934713408
    %v961 = vunpack.c.0.s8 %v960
    %v962 = vlaneseq
    %v963 = vshrl.u32 %v962, 7
    %v964 = vsub.s32 %v961, %v963
    %v965 = vrot.slane %v951, %v964
    %v966 = vcombine.low %v910, %v926
    %v967 = vcombine.high %v910, %v926
    %v969 = vunpack.c.l.s4 1934713408
    %v970 = vunpack.c.0.s8 %v969
    %v971 = vlaneseq
    %v972 = vshrl.u32 %v971, 7
    %v973 = vsub.s32 %v970, %v972
    %v974 = vrot.slane %v966, %v973
    %v976 = vunpack.c.l.s4 1934713408
    %v977 = vunpack.c.0.s8 %v976
    %v978 = vlaneseq
    %v979 = vshrl.u32 %v978, 7
    %v980 = vsub.s32 %v977, %v979
    %v981 = vrot.slane %v967, %v980
    %v982 = vcombine.low %v917, %v933
    %v983 = vcombine.high %v917, %v933
    %v985 = vunpack.c.l.s4 1934713408
    %v986 = vunpack.c.0.s8 %v985
    %v987 = vlaneseq
    %v988 = vshrl.u32 %v987, 7
    %v989 = vsub.s32 %v986, %v988
    %v990 = vrot.slane %v982, %v989
    %v992 = vunpack.c.l.s4 1934713408
    %v993 = vunpack.c.0.s8 %v992
    %v994 = vlaneseq
    %v995 = vshrl.u32 %v994, 7
    %v996 = vsub.s32 %v993, %v995
    %v997 = vrot.slane %v983, %v996
    %v998 = vcombine.low %v942, %v974
    %v999 = vcombine.high %v942, %v974
    %v1000 = vcombine.low %v949, %v981
    %v1001 = vcombine.high %v949, %v981
    %v1002 = vcombine.low %v958, %v990
    %v1003 = vcombine.high %v958, %v990
    %v1004 = vcombine.low %v965, %v997
    %v1005 = vcombine.high %v965, %v997
    %1006 = vmatprep.subr.mxu0 0.0
    %1007 = vmatpush1.xpose.msra.mxu0 %v189
    %1008 = vmatprep.subr.mxu0 0.0
    %1009 = vmatpush1.xpose.msra.mxu0 0.0
    %1010 = vmatprep.subr.mxu0 0.0
    %1011 = vmatpush1.xpose.msra.mxu0 0.0
    %1012 = vmatprep.subr.mxu0 0.0
    %1013 = vmatpush1.xpose.msra.mxu0 0.0
    %1014 = vmatprep.subr.mxu0 0.0
    %1015 = vmatpush1.xpose.msra.mxu0 0.0
    %1016 = vmatprep.subr.mxu0 0.0
    %1017 = vmatpush1.xpose.msra.mxu0 0.0
    %1018 = vmatprep.subr.mxu0 0.0
    %1019 = vmatpush1.xpose.msra.mxu0 0.0
    %1020 = vmatprep.subr.mxu0 0.0
    %1021 = vmatpush1.xpose.msra.mxu0 0.0
    %1022 = vmatprep.subr.mxu0 0.0
    %1023 = vmatpush1.xpose.msra.mxu0 0.0
    %1024 = vmatprep.subr.mxu0 0.0
    %1025 = vmatpush1.xpose.msra.mxu0 0.0
    %1026 = vmatprep.subr.mxu0 0.0
    %1027 = vmatpush1.xpose.msra.mxu0 0.0
    %1028 = vmatprep.subr.mxu0 0.0
    %1029 = vmatpush1.xpose.msra.mxu0 0.0
    %1030 = vmatprep.subr.mxu0 0.0
    %1031 = vmatpush1.xpose.msra.mxu0 0.0
    %1032 = vmatprep.subr.mxu0 0.0
    %1033 = vmatpush1.xpose.msra.mxu0 0.0
    %1034 = vmatprep.subr.mxu0 0.0
    %1035 = vmatpush1.xpose.msra.mxu0 0.0
    %1036 = vmatprep.subr.mxu0 0.0
    %1037 = vmatpush1.xpose.msra.mxu0 0.0
    %1038 = vmatprep.subr.mxu0 0.0
    %1039 = vmatpush1.xpose.msra.mxu0 0.0
    %1040 = vmatprep.subr.mxu0 0.0
    %1041 = vmatpush1.xpose.msra.mxu0 0.0
    %1042 = vmatprep.subr.mxu0 0.0
    %1043 = vmatpush1.xpose.msra.mxu0 0.0
    %1044 = vmatprep.subr.mxu0 0.0
    %1045 = vmatpush1.xpose.msra.mxu0 0.0
    %1046 = vmatprep.subr.mxu0 0.0
    %1047 = vmatpush1.xpose.msra.mxu0 0.0
    %1048 = vmatprep.subr.mxu0 0.0
    %1049 = vmatpush1.xpose.msra.mxu0 0.0
    %1050 = vmatprep.subr.mxu0 0.0
    %1051 = vmatpush1.xpose.msra.mxu0 0.0
    %1052 = vmatprep.subr.mxu0 0.0
    %1053 = vmatpush1.xpose.msra.mxu0 0.0
    %1054 = vmatprep.subr.mxu0 0.0
    %1055 = vmatpush1.xpose.msra.mxu0 0.0
    %1056 = vmatprep.subr.mxu0 0.0
    %1057 = vmatpush1.xpose.msra.mxu0 0.0
    %1058 = vmatprep.subr.mxu0 0.0
    %1059 = vmatpush1.xpose.msra.mxu0 0.0
    %1060 = vmatprep.subr.mxu0 0.0
    %1061 = vmatpush1.xpose.msra.mxu0 0.0
    %1062 = vmatprep.subr.mxu0 0.0
    %1063 = vmatpush1.xpose.msra.mxu0 0.0
    %1064 = vmatprep.subr.mxu0 0.0
    %1065 = vmatpush1.xpose.msra.mxu0 0.0
    %1066 = vmatprep.subr.mxu0 0.0
    %1067 = vmatpush1.xpose.msra.mxu0 0.0
    %1068 = vmatprep.subr.mxu0 0.0
    %1069 = vmatpush1.xpose.msra.mxu0 0.0
    %1070 = vmatprep.mubr.f32.mxu0 0.0
    %1071 = vmatmul.mubr.f32.gmra.mrb[0].mxu0 %v862
    %v1072 = vpop.f32.mrb[0].mxu0
    %v1073 = vadd.f32 0.0, %v1072
    %v1074 = vpop.f32.mrb[0].mxu0
    %1075 = vmatprep.mubr.f32.mxu0 0.0
    %1076 = vmatmul.mubr.f32.gmra.mrb[0].mxu0 %v998
    %v1077 = vpop.f32.mrb[0].mxu0
    %v1078 = vadd.f32 0.0, %v1077
    %v1079 = vpop.f32.mrb[0].mxu0
    %1080 = vdwg.mxu0
    %1081 = vmatprep.subr.mxu0 0.0
    %1082 = vmatpush1.xpose.msra.mxu0 %v190
    %1083 = vmatprep.subr.mxu0 0.0
    %1084 = vmatpush1.xpose.msra.mxu0 0.0
    %1085 = vmatprep.subr.mxu0 0.0
    %1086 = vmatpush1.xpose.msra.mxu0 0.0
    %1087 = vmatprep.subr.mxu0 0.0
    %1088 = vmatpush1.xpose.msra.mxu0 0.0
    %1089 = vmatprep.subr.mxu0 0.0
    %1090 = vmatpush1.xpose.msra.mxu0 0.0
    %1091 = vmatprep.subr.mxu0 0.0
    %1092 = vmatpush1.xpose.msra.mxu0 0.0
    %1093 = vmatprep.subr.mxu0 0.0
    %1094 = vmatpush1.xpose.msra.mxu0 0.0
    %1095 = vmatprep.subr.mxu0 0.0
    %1096 = vmatpush1.xpose.msra.mxu0 0.0
    %1097 = vmatprep.subr.mxu0 0.0
    %1098 = vmatpush1.xpose.msra.mxu0 0.0
    %1099 = vmatprep.subr.mxu0 0.0
    %1100 = vmatpush1.xpose.msra.mxu0 0.0
    %1101 = vmatprep.subr.mxu0 0.0
    %1102 = vmatpush1.xpose.msra.mxu0 0.0
    %1103 = vmatprep.subr.mxu0 0.0
    %1104 = vmatpush1.xpose.msra.mxu0 0.0
    %1105 = vmatprep.subr.mxu0 0.0
    %1106 = vmatpush1.xpose.msra.mxu0 0.0
    %1107 = vmatprep.subr.mxu0 0.0
    %1108 = vmatpush1.xpose.msra.mxu0 0.0
    %1109 = vmatprep.subr.mxu0 0.0
    %1110 = vmatpush1.xpose.msra.mxu0 0.0
    %1111 = vmatprep.subr.mxu0 0.0
    %1112 = vmatpush1.xpose.msra.mxu0 0.0
    %1113 = vmatprep.subr.mxu0 0.0
    %1114 = vmatpush1.xpose.msra.mxu0 0.0
    %1115 = vmatprep.subr.mxu0 0.0
    %1116 = vmatpush1.xpose.msra.mxu0 0.0
    %1117 = vmatprep.subr.mxu0 0.0
    %1118 = vmatpush1.xpose.msra.mxu0 0.0
    %1119 = vmatprep.subr.mxu0 0.0
    %1120 = vmatpush1.xpose.msra.mxu0 0.0
    %1121 = vmatprep.subr.mxu0 0.0
    %1122 = vmatpush1.xpose.msra.mxu0 0.0
    %1123 = vmatprep.subr.mxu0 0.0
    %1124 = vmatpush1.xpose.msra.mxu0 0.0
    %1125 = vmatprep.subr.mxu0 0.0
    %1126 = vmatpush1.xpose.msra.mxu0 0.0
    %1127 = vmatprep.subr.mxu0 0.0
    %1128 = vmatpush1.xpose.msra.mxu0 0.0
    %1129 = vmatprep.subr.mxu0 0.0
    %1130 = vmatpush1.xpose.msra.mxu0 0.0
    %1131 = vmatprep.subr.mxu0 0.0
    %1132 = vmatpush1.xpose.msra.mxu0 0.0
    %1133 = vmatprep.subr.mxu0 0.0
    %1134 = vmatpush1.xpose.msra.mxu0 0.0
    %1135 = vmatprep.subr.mxu0 0.0
    %1136 = vmatpush1.xpose.msra.mxu0 0.0
    %1137 = vmatprep.subr.mxu0 0.0
    %1138 = vmatpush1.xpose.msra.mxu0 0.0
    %1139 = vmatprep.subr.mxu0 0.0
    %1140 = vmatpush1.xpose.msra.mxu0 0.0
    %1141 = vmatprep.subr.mxu0 0.0
    %1142 = vmatpush1.xpose.msra.mxu0 0.0
    %1143 = vmatprep.subr.mxu0 0.0
    %1144 = vmatpush1.xpose.msra.mxu0 0.0
    %1145 = vmatprep.mubr.f32.mxu0 0.0
    %1146 = vmatmul.mubr.f32.gmra.mrb[0].mxu0 %v863
    %v1147 = vpop.f32.mrb[0].mxu0
    %v1148 = vadd.f32 0.0, %v1147
    %v1149 = vpop.f32.mrb[0].mxu0
    %1150 = vmatprep.mubr.f32.mxu0 0.0
    %1151 = vmatmul.mubr.f32.gmra.mrb[0].mxu0 %v999
    %v1152 = vpop.f32.mrb[0].mxu0
    %v1153 = vadd.f32 0.0, %v1152
    %v1154 = vpop.f32.mrb[0].mxu0
    %1155 = vdwg.mxu0
    %1156 = vmatprep.subr.mxu0 0.0
    %1157 = vmatpush1.xpose.msra.mxu0 %v191
    %1158 = vmatprep.subr.mxu0 0.0
    %1159 = vmatpush1.xpose.msra.mxu0 0.0
    %1160 = vmatprep.subr.mxu0 0.0
    %1161 = vmatpush1.xpose.msra.mxu0 0.0
    %1162 = vmatprep.subr.mxu0 0.0
    %1163 = vmatpush1.xpose.msra.mxu0 0.0
    %1164 = vmatprep.subr.mxu0 0.0
    %1165 = vmatpush1.xpose.msra.mxu0 0.0
    %1166 = vmatprep.subr.mxu0 0.0
    %1167 = vmatpush1.xpose.msra.mxu0 0.0
    %1168 = vmatprep.subr.mxu0 0.0
    %1169 = vmatpush1.xpose.msra.mxu0 0.0
    %1170 = vmatprep.subr.mxu0 0.0
    %1171 = vmatpush1.xpose.msra.mxu0 0.0
    %1172 = vmatprep.subr.mxu0 0.0
    %1173 = vmatpush1.xpose.msra.mxu0 0.0
    %1174 = vmatprep.subr.mxu0 0.0
    %1175 = vmatpush1.xpose.msra.mxu0 0.0
    %1176 = vmatprep.subr.mxu0 0.0
    %1177 = vmatpush1.xpose.msra.mxu0 0.0
    %1178 = vmatprep.subr.mxu0 0.0
    %1179 = vmatpush1.xpose.msra.mxu0 0.0
    %1180 = vmatprep.subr.mxu0 0.0
    %1181 = vmatpush1.xpose.msra.mxu0 0.0
    %1182 = vmatprep.subr.mxu0 0.0
    %1183 = vmatpush1.xpose.msra.mxu0 0.0
    %1184 = vmatprep.subr.mxu0 0.0
    %1185 = vmatpush1.xpose.msra.mxu0 0.0
    %1186 = vmatprep.subr.mxu0 0.0
    %1187 = vmatpush1.xpose.msra.mxu0 0.0
    %1188 = vmatprep.subr.mxu0 0.0
    %1189 = vmatpush1.xpose.msra.mxu0 0.0
    %1190 = vmatprep.subr.mxu0 0.0
    %1191 = vmatpush1.xpose.msra.mxu0 0.0
    %1192 = vmatprep.subr.mxu0 0.0
    %1193 = vmatpush1.xpose.msra.mxu0 0.0
    %1194 = vmatprep.subr.mxu0 0.0
    %1195 = vmatpush1.xpose.msra.mxu0 0.0
    %1196 = vmatprep.subr.mxu0 0.0
    %1197 = vmatpush1.xpose.msra.mxu0 0.0
    %1198 = vmatprep.subr.mxu0 0.0
    %1199 = vmatpush1.xpose.msra.mxu0 0.0
    %1200 = vmatprep.subr.mxu0 0.0
    %1201 = vmatpush1.xpose.msra.mxu0 0.0
    %1202 = vmatprep.subr.mxu0 0.0
    %1203 = vmatpush1.xpose.msra.mxu0 0.0
    %1204 = vmatprep.subr.mxu0 0.0
    %1205 = vmatpush1.xpose.msra.mxu0 0.0
    %1206 = vmatprep.subr.mxu0 0.0
    %1207 = vmatpush1.xpose.msra.mxu0 0.0
    %1208 = vmatprep.subr.mxu0 0.0
    %1209 = vmatpush1.xpose.msra.mxu0 0.0
    %1210 = vmatprep.subr.mxu0 0.0
    %1211 = vmatpush1.xpose.msra.mxu0 0.0
    %1212 = vmatprep.subr.mxu0 0.0
    %1213 = vmatpush1.xpose.msra.mxu0 0.0
    %1214 = vmatprep.subr.mxu0 0.0
    %1215 = vmatpush1.xpose.msra.mxu0 0.0
    %1216 = vmatprep.subr.mxu0 0.0
    %1217 = vmatpush1.xpose.msra.mxu0 0.0
    %1218 = vmatprep.subr.mxu0 0.0
    %1219 = vmatpush1.xpose.msra.mxu0 0.0
    %1220 = vmatprep.mubr.f32.mxu0 0.0
    %1221 = vmatmul.mubr.f32.gmra.mrb[0].mxu0 %v864
    %v1222 = vpop.f32.mrb[0].mxu0
    %v1223 = vadd.f32 0.0, %v1222
    %v1224 = vpop.f32.mrb[0].mxu0
    %1225 = vmatprep.mubr.f32.mxu0 0.0
    %1226 = vmatmul.mubr.f32.gmra.mrb[0].mxu0 %v1000
    %v1227 = vpop.f32.mrb[0].mxu0
    %v1228 = vadd.f32 0.0, %v1227
    %v1229 = vpop.f32.mrb[0].mxu0
    %1230 = vdwg.mxu0
    %1231 = vmatprep.subr.mxu0 0.0
    %1232 = vmatpush1.xpose.msra.mxu0 %v192
    %1233 = vmatprep.subr.mxu0 0.0
    %1234 = vmatpush1.xpose.msra.mxu0 0.0
    %1235 = vmatprep.subr.mxu0 0.0
    %1236 = vmatpush1.xpose.msra.mxu0 0.0
    %1237 = vmatprep.subr.mxu0 0.0
    %1238 = vmatpush1.xpose.msra.mxu0 0.0
    %1239 = vmatprep.subr.mxu0 0.0
    %1240 = vmatpush1.xpose.msra.mxu0 0.0
    %1241 = vmatprep.subr.mxu0 0.0
    %1242 = vmatpush1.xpose.msra.mxu0 0.0
    %1243 = vmatprep.subr.mxu0 0.0
    %1244 = vmatpush1.xpose.msra.mxu0 0.0
    %1245 = vmatprep.subr.mxu0 0.0
    %1246 = vmatpush1.xpose.msra.mxu0 0.0
    %1247 = vmatprep.subr.mxu0 0.0
    %1248 = vmatpush1.xpose.msra.mxu0 0.0
    %1249 = vmatprep.subr.mxu0 0.0
    %1250 = vmatpush1.xpose.msra.mxu0 0.0
    %1251 = vmatprep.subr.mxu0 0.0
    %1252 = vmatpush1.xpose.msra.mxu0 0.0
    %1253 = vmatprep.subr.mxu0 0.0
    %1254 = vmatpush1.xpose.msra.mxu0 0.0
    %1255 = vmatprep.subr.mxu0 0.0
    %1256 = vmatpush1.xpose.msra.mxu0 0.0
    %1257 = vmatprep.subr.mxu0 0.0
    %1258 = vmatpush1.xpose.msra.mxu0 0.0
    %1259 = vmatprep.subr.mxu0 0.0
    %1260 = vmatpush1.xpose.msra.mxu0 0.0
    %1261 = vmatprep.subr.mxu0 0.0
    %1262 = vmatpush1.xpose.msra.mxu0 0.0
    %1263 = vmatprep.subr.mxu0 0.0
    %1264 = vmatpush1.xpose.msra.mxu0 0.0
    %1265 = vmatprep.subr.mxu0 0.0
    %1266 = vmatpush1.xpose.msra.mxu0 0.0
    %1267 = vmatprep.subr.mxu0 0.0
    %1268 = vmatpush1.xpose.msra.mxu0 0.0
    %1269 = vmatprep.subr.mxu0 0.0
    %1270 = vmatpush1.xpose.msra.mxu0 0.0
    %1271 = vmatprep.subr.mxu0 0.0
    %1272 = vmatpush1.xpose.msra.mxu0 0.0
    %1273 = vmatprep.subr.mxu0 0.0
    %1274 = vmatpush1.xpose.msra.mxu0 0.0
    %1275 = vmatprep.subr.mxu0 0.0
    %1276 = vmatpush1.xpose.msra.mxu0 0.0
    %1277 = vmatprep.subr.mxu0 0.0
    %1278 = vmatpush1.xpose.msra.mxu0 0.0
    %1279 = vmatprep.subr.mxu0 0.0
    %1280 = vmatpush1.xpose.msra.mxu0 0.0
    %1281 = vmatprep.subr.mxu0 0.0
    %1282 = vmatpush1.xpose.msra.mxu0 0.0
    %1283 = vmatprep.subr.mxu0 0.0
    %1284 = vmatpush1.xpose.msra.mxu0 0.0
    %1285 = vmatprep.subr.mxu0 0.0
    %1286 = vmatpush1.xpose.msra.mxu0 0.0
    %1287 = vmatprep.subr.mxu0 0.0
    %1288 = vmatpush1.xpose.msra.mxu0 0.0
    %1289 = vmatprep.subr.mxu0 0.0
    %1290 = vmatpush1.xpose.msra.mxu0 0.0
    %1291 = vmatprep.subr.mxu0 0.0
    %1292 = vmatpush1.xpose.msra.mxu0 0.0
    %1293 = vmatprep.subr.mxu0 0.0
    %1294 = vmatpush1.xpose.msra.mxu0 0.0
    %1295 = vmatprep.mubr.f32.mxu0 0.0
    %1296 = vmatmul.mubr.f32.gmra.mrb[0].mxu0 %v865
    %v1297 = vpop.f32.mrb[0].mxu0
    %v1298 = vadd.f32 0.0, %v1297
    %v1299 = vpop.f32.mrb[0].mxu0
    %1300 = vmatprep.mubr.f32.mxu0 0.0
    %1301 = vmatmul.mubr.f32.gmra.mrb[0].mxu0 %v1001
    %v1302 = vpop.f32.mrb[0].mxu0
    %v1303 = vadd.f32 0.0, %v1302
    %v1304 = vpop.f32.mrb[0].mxu0
    %1305 = vdwg.mxu0
    %1306 = vmatprep.subr.mxu0 0.0
    %1307 = vmatpush1.xpose.msra.mxu0 %v193
    %1308 = vmatprep.subr.mxu0 0.0
    %1309 = vmatpush1.xpose.msra.mxu0 0.0
    %1310 = vmatprep.subr.mxu0 0.0
    %1311 = vmatpush1.xpose.msra.mxu0 0.0
    %1312 = vmatprep.subr.mxu0 0.0
    %1313 = vmatpush1.xpose.msra.mxu0 0.0
    %1314 = vmatprep.subr.mxu0 0.0
    %1315 = vmatpush1.xpose.msra.mxu0 0.0
    %1316 = vmatprep.subr.mxu0 0.0
    %1317 = vmatpush1.xpose.msra.mxu0 0.0
    %1318 = vmatprep.subr.mxu0 0.0
    %1319 = vmatpush1.xpose.msra.mxu0 0.0
    %1320 = vmatprep.subr.mxu0 0.0
    %1321 = vmatpush1.xpose.msra.mxu0 0.0
    %1322 = vmatprep.subr.mxu0 0.0
    %1323 = vmatpush1.xpose.msra.mxu0 0.0
    %1324 = vmatprep.subr.mxu0 0.0
    %1325 = vmatpush1.xpose.msra.mxu0 0.0
    %1326 = vmatprep.subr.mxu0 0.0
    %1327 = vmatpush1.xpose.msra.mxu0 0.0
    %1328 = vmatprep.subr.mxu0 0.0
    %1329 = vmatpush1.xpose.msra.mxu0 0.0
    %1330 = vmatprep.subr.mxu0 0.0
    %1331 = vmatpush1.xpose.msra.mxu0 0.0
    %1332 = vmatprep.subr.mxu0 0.0
    %1333 = vmatpush1.xpose.msra.mxu0 0.0
    %1334 = vmatprep.subr.mxu0 0.0
    %1335 = vmatpush1.xpose.msra.mxu0 0.0
    %1336 = vmatprep.subr.mxu0 0.0
    %1337 = vmatpush1.xpose.msra.mxu0 0.0
    %1338 = vmatprep.subr.mxu0 0.0
    %1339 = vmatpush1.xpose.msra.mxu0 0.0
    %1340 = vmatprep.subr.mxu0 0.0
    %1341 = vmatpush1.xpose.msra.mxu0 0.0
    %1342 = vmatprep.subr.mxu0 0.0
    %1343 = vmatpush1.xpose.msra.mxu0 0.0
    %1344 = vmatprep.subr.mxu0 0.0
    %1345 = vmatpush1.xpose.msra.mxu0 0.0
    %1346 = vmatprep.subr.mxu0 0.0
    %1347 = vmatpush1.xpose.msra.mxu0 0.0
    %1348 = vmatprep.subr.mxu0 0.0
    %1349 = vmatpush1.xpose.msra.mxu0 0.0
    %1350 = vmatprep.subr.mxu0 0.0
    %1351 = vmatpush1.xpose.msra.mxu0 0.0
    %1352 = vmatprep.subr.mxu0 0.0
    %1353 = vmatpush1.xpose.msra.mxu0 0.0
    %1354 = vmatprep.subr.mxu0 0.0
    %1355 = vmatpush1.xpose.msra.mxu0 0.0
    %1356 = vmatprep.subr.mxu0 0.0
    %1357 = vmatpush1.xpose.msra.mxu0 0.0
    %1358 = vmatprep.subr.mxu0 0.0
    %1359 = vmatpush1.xpose.msra.mxu0 0.0
    %1360 = vmatprep.subr.mxu0 0.0
    %1361 = vmatpush1.xpose.msra.mxu0 0.0
    %1362 = vmatprep.subr.mxu0 0.0
    %1363 = vmatpush1.xpose.msra.mxu0 0.0
    %1364 = vmatprep.subr.mxu0 0.0
    %1365 = vmatpush1.xpose.msra.mxu0 0.0
    %1366 = vmatprep.subr.mxu0 0.0
    %1367 = vmatpush1.xpose.msra.mxu0 0.0
    %1368 = vmatprep.subr.mxu0 0.0
    %1369 = vmatpush1.xpose.msra.mxu0 0.0
    %1370 = vmatprep.mubr.f32.mxu0 0.0
    %1371 = vmatmul.mubr.f32.gmra.mrb[0].mxu0 %v866
    %v1372 = vpop.f32.mrb[0].mxu0
    %v1373 = vadd.f32 0.0, %v1372
    %v1374 = vpop.f32.mrb[0].mxu0
    %1375 = vmatprep.mubr.f32.mxu0 0.0
    %1376 = vmatmul.mubr.f32.gmra.mrb[0].mxu0 %v1002
    %v1377 = vpop.f32.mrb[0].mxu0
    %v1378 = vadd.f32 0.0, %v1377
    %v1379 = vpop.f32.mrb[0].mxu0
    %1380 = vdwg.mxu0
    %1381 = vmatprep.subr.mxu0 0.0
    %1382 = vmatpush1.xpose.msra.mxu0 %v194
    %1383 = vmatprep.subr.mxu0 0.0
    %1384 = vmatpush1.xpose.msra.mxu0 0.0
    %1385 = vmatprep.subr.mxu0 0.0
    %1386 = vmatpush1.xpose.msra.mxu0 0.0
    %1387 = vmatprep.subr.mxu0 0.0
    %1388 = vmatpush1.xpose.msra.mxu0 0.0
    %1389 = vmatprep.subr.mxu0 0.0
    %1390 = vmatpush1.xpose.msra.mxu0 0.0
    %1391 = vmatprep.subr.mxu0 0.0
    %1392 = vmatpush1.xpose.msra.mxu0 0.0
    %1393 = vmatprep.subr.mxu0 0.0
    %1394 = vmatpush1.xpose.msra.mxu0 0.0
    %1395 = vmatprep.subr.mxu0 0.0
    %1396 = vmatpush1.xpose.msra.mxu0 0.0
    %1397 = vmatprep.subr.mxu0 0.0
    %1398 = vmatpush1.xpose.msra.mxu0 0.0
    %1399 = vmatprep.subr.mxu0 0.0
    %1400 = vmatpush1.xpose.msra.mxu0 0.0
    %1401 = vmatprep.subr.mxu0 0.0
    %1402 = vmatpush1.xpose.msra.mxu0 0.0
    %1403 = vmatprep.subr.mxu0 0.0
    %1404 = vmatpush1.xpose.msra.mxu0 0.0
    %1405 = vmatprep.subr.mxu0 0.0
    %1406 = vmatpush1.xpose.msra.mxu0 0.0
    %1407 = vmatprep.subr.mxu0 0.0
    %1408 = vmatpush1.xpose.msra.mxu0 0.0
    %1409 = vmatprep.subr.mxu0 0.0
    %1410 = vmatpush1.xpose.msra.mxu0 0.0
    %1411 = vmatprep.subr.mxu0 0.0
    %1412 = vmatpush1.xpose.msra.mxu0 0.0
    %1413 = vmatprep.subr.mxu0 0.0
    %1414 = vmatpush1.xpose.msra.mxu0 0.0
    %1415 = vmatprep.subr.mxu0 0.0
    %1416 = vmatpush1.xpose.msra.mxu0 0.0
    %1417 = vmatprep.subr.mxu0 0.0
    %1418 = vmatpush1.xpose.msra.mxu0 0.0
    %1419 = vmatprep.subr.mxu0 0.0
    %1420 = vmatpush1.xpose.msra.mxu0 0.0
    %1421 = vmatprep.subr.mxu0 0.0
    %1422 = vmatpush1.xpose.msra.mxu0 0.0
    %1423 = vmatprep.subr.mxu0 0.0
    %1424 = vmatpush1.xpose.msra.mxu0 0.0
    %1425 = vmatprep.subr.mxu0 0.0
    %1426 = vmatpush1.xpose.msra.mxu0 0.0
    %1427 = vmatprep.subr.mxu0 0.0
    %1428 = vmatpush1.xpose.msra.mxu0 0.0
    %1429 = vmatprep.subr.mxu0 0.0
    %1430 = vmatpush1.xpose.msra.mxu0 0.0
    %1431 = vmatprep.subr.mxu0 0.0
    %1432 = vmatpush1.xpose.msra.mxu0 0.0
    %1433 = vmatprep.subr.mxu0 0.0
    %1434 = vmatpush1.xpose.msra.mxu0 0.0
    %1435 = vmatprep.subr.mxu0 0.0
    %1436 = vmatpush1.xpose.msra.mxu0 0.0
    %1437 = vmatprep.subr.mxu0 0.0
    %1438 = vmatpush1.xpose.msra.mxu0 0.0
    %1439 = vmatprep.subr.mxu0 0.0
    %1440 = vmatpush1.xpose.msra.mxu0 0.0
    %1441 = vmatprep.subr.mxu0 0.0
    %1442 = vmatpush1.xpose.msra.mxu0 0.0
    %1443 = vmatprep.subr.mxu0 0.0
    %1444 = vmatpush1.xpose.msra.mxu0 0.0
    %1445 = vmatprep.mubr.f32.mxu0 0.0
    %1446 = vmatmul.mubr.f32.gmra.mrb[0].mxu0 %v867
    %v1447 = vpop.f32.mrb[0].mxu0
    %v1448 = vadd.f32 0.0, %v1447
    %v1449 = vpop.f32.mrb[0].mxu0
    %1450 = vmatprep.mubr.f32.mxu0 0.0
    %1451 = vmatmul.mubr.f32.gmra.mrb[0].mxu0 %v1003
    %v1452 = vpop.f32.mrb[0].mxu0
    %v1453 = vadd.f32 0.0, %v1452
    %v1454 = vpop.f32.mrb[0].mxu0
    %1455 = vdwg.mxu0
    %1456 = vmatprep.subr.mxu0 0.0
    %1457 = vmatpush1.xpose.msra.mxu0 %v195
    %1458 = vmatprep.subr.mxu0 0.0
    %1459 = vmatpush1.xpose.msra.mxu0 0.0
    %1460 = vmatprep.subr.mxu0 0.0
    %1461 = vmatpush1.xpose.msra.mxu0 0.0
    %1462 = vmatprep.subr.mxu0 0.0
    %1463 = vmatpush1.xpose.msra.mxu0 0.0
    %1464 = vmatprep.subr.mxu0 0.0
    %1465 = vmatpush1.xpose.msra.mxu0 0.0
    %1466 = vmatprep.subr.mxu0 0.0
    %1467 = vmatpush1.xpose.msra.mxu0 0.0
    %1468 = vmatprep.subr.mxu0 0.0
    %1469 = vmatpush1.xpose.msra.mxu0 0.0
    %1470 = vmatprep.subr.mxu0 0.0
    %1471 = vmatpush1.xpose.msra.mxu0 0.0
    %1472 = vmatprep.subr.mxu0 0.0
    %1473 = vmatpush1.xpose.msra.mxu0 0.0
    %1474 = vmatprep.subr.mxu0 0.0
    %1475 = vmatpush1.xpose.msra.mxu0 0.0
    %1476 = vmatprep.subr.mxu0 0.0
    %1477 = vmatpush1.xpose.msra.mxu0 0.0
    %1478 = vmatprep.subr.mxu0 0.0
    %1479 = vmatpush1.xpose.msra.mxu0 0.0
    %1480 = vmatprep.subr.mxu0 0.0
    %1481 = vmatpush1.xpose.msra.mxu0 0.0
    %1482 = vmatprep.subr.mxu0 0.0
    %1483 = vmatpush1.xpose.msra.mxu0 0.0
    %1484 = vmatprep.subr.mxu0 0.0
    %1485 = vmatpush1.xpose.msra.mxu0 0.0
    %1486 = vmatprep.subr.mxu0 0.0
    %1487 = vmatpush1.xpose.msra.mxu0 0.0
    %1488 = vmatprep.subr.mxu0 0.0
    %1489 = vmatpush1.xpose.msra.mxu0 0.0
    %1490 = vmatprep.subr.mxu0 0.0
    %1491 = vmatpush1.xpose.msra.mxu0 0.0
    %1492 = vmatprep.subr.mxu0 0.0
    %1493 = vmatpush1.xpose.msra.mxu0 0.0
    %1494 = vmatprep.subr.mxu0 0.0
    %1495 = vmatpush1.xpose.msra.mxu0 0.0
    %1496 = vmatprep.subr.mxu0 0.0
    %1497 = vmatpush1.xpose.msra.mxu0 0.0
    %1498 = vmatprep.subr.mxu0 0.0
    %1499 = vmatpush1.xpose.msra.mxu0 0.0
    %1500 = vmatprep.subr.mxu0 0.0
    %1501 = vmatpush1.xpose.msra.mxu0 0.0
    %1502 = vmatprep.subr.mxu0 0.0
    %1503 = vmatpush1.xpose.msra.mxu0 0.0
    %1504 = vmatprep.subr.mxu0 0.0
    %1505 = vmatpush1.xpose.msra.mxu0 0.0
    %1506 = vmatprep.subr.mxu0 0.0
    %1507 = vmatpush1.xpose.msra.mxu0 0.0
    %1508 = vmatprep.subr.mxu0 0.0
    %1509 = vmatpush1.xpose.msra.mxu0 0.0
    %1510 = vmatprep.subr.mxu0 0.0
    %1511 = vmatpush1.xpose.msra.mxu0 0.0
    %1512 = vmatprep.subr.mxu0 0.0
    %1513 = vmatpush1.xpose.msra.mxu0 0.0
    %1514 = vmatprep.subr.mxu0 0.0
    %1515 = vmatpush1.xpose.msra.mxu0 0.0
    %1516 = vmatprep.subr.mxu0 0.0
    %1517 = vmatpush1.xpose.msra.mxu0 0.0
    %1518 = vmatprep.subr.mxu0 0.0
    %1519 = vmatpush1.xpose.msra.mxu0 0.0
    %1520 = vmatprep.mubr.f32.mxu0 0.0
    %1521 = vmatmul.mubr.f32.gmra.mrb[0].mxu0 %v868
    %v1522 = vpop.f32.mrb[0].mxu0
    %v1523 = vadd.f32 0.0, %v1522
    %v1524 = vpop.f32.mrb[0].mxu0
    %1525 = vmatprep.mubr.f32.mxu0 0.0
    %1526 = vmatmul.mubr.f32.gmra.mrb[0].mxu0 %v1004
    %v1527 = vpop.f32.mrb[0].mxu0
    %v1528 = vadd.f32 0.0, %v1527
    %v1529 = vpop.f32.mrb[0].mxu0
    %1530 = vdwg.mxu0
    %1531 = vmatprep.subr.mxu0 0.0
    %1532 = vmatpush1.xpose.msra.mxu0 %v196
    %1533 = vmatprep.subr.mxu0 0.0
    %1534 = vmatpush1.xpose.msra.mxu0 0.0
    %1535 = vmatprep.subr.mxu0 0.0
    %1536 = vmatpush1.xpose.msra.mxu0 0.0
    %1537 = vmatprep.subr.mxu0 0.0
    %1538 = vmatpush1.xpose.msra.mxu0 0.0
    %1539 = vmatprep.subr.mxu0 0.0
    %1540 = vmatpush1.xpose.msra.mxu0 0.0
    %1541 = vmatprep.subr.mxu0 0.0
    %1542 = vmatpush1.xpose.msra.mxu0 0.0
    %1543 = vmatprep.subr.mxu0 0.0
    %1544 = vmatpush1.xpose.msra.mxu0 0.0
    %1545 = vmatprep.subr.mxu0 0.0
    %1546 = vmatpush1.xpose.msra.mxu0 0.0
    %1547 = vmatprep.subr.mxu0 0.0
    %1548 = vmatpush1.xpose.msra.mxu0 0.0
    %1549 = vmatprep.subr.mxu0 0.0
    %1550 = vmatpush1.xpose.msra.mxu0 0.0
    %1551 = vmatprep.subr.mxu0 0.0
    %1552 = vmatpush1.xpose.msra.mxu0 0.0
    %1553 = vmatprep.subr.mxu0 0.0
    %1554 = vmatpush1.xpose.msra.mxu0 0.0
    %1555 = vmatprep.subr.mxu0 0.0
    %1556 = vmatpush1.xpose.msra.mxu0 0.0
    %1557 = vmatprep.subr.mxu0 0.0
    %1558 = vmatpush1.xpose.msra.mxu0 0.0
    %1559 = vmatprep.subr.mxu0 0.0
    %1560 = vmatpush1.xpose.msra.mxu0 0.0
    %1561 = vmatprep.subr.mxu0 0.0
    %1562 = vmatpush1.xpose.msra.mxu0 0.0
    %1563 = vmatprep.subr.mxu0 0.0
    %1564 = vmatpush1.xpose.msra.mxu0 0.0
    %1565 = vmatprep.subr.mxu0 0.0
    %1566 = vmatpush1.xpose.msra.mxu0 0.0
    %1567 = vmatprep.subr.mxu0 0.0
    %1568 = vmatpush1.xpose.msra.mxu0 0.0
    %1569 = vmatprep.subr.mxu0 0.0
    %1570 = vmatpush1.xpose.msra.mxu0 0.0
    %1571 = vmatprep.subr.mxu0 0.0
    %1572 = vmatpush1.xpose.msra.mxu0 0.0
    %1573 = vmatprep.subr.mxu0 0.0
    %1574 = vmatpush1.xpose.msra.mxu0 0.0
    %1575 = vmatprep.subr.mxu0 0.0
    %1576 = vmatpush1.xpose.msra.mxu0 0.0
    %1577 = vmatprep.subr.mxu0 0.0
    %1578 = vmatpush1.xpose.msra.mxu0 0.0
    %1579 = vmatprep.subr.mxu0 0.0
    %1580 = vmatpush1.xpose.msra.mxu0 0.0
    %1581 = vmatprep.subr.mxu0 0.0
    %1582 = vmatpush1.xpose.msra.mxu0 0.0
    %1583 = vmatprep.subr.mxu0 0.0
    %1584 = vmatpush1.xpose.msra.mxu0 0.0
    %1585 = vmatprep.subr.mxu0 0.0
    %1586 = vmatpush1.xpose.msra.mxu0 0.0
    %1587 = vmatprep.subr.mxu0 0.0
    %1588 = vmatpush1.xpose.msra.mxu0 0.0
    %1589 = vmatprep.subr.mxu0 0.0
    %1590 = vmatpush1.xpose.msra.mxu0 0.0
    %1591 = vmatprep.subr.mxu0 0.0
    %1592 = vmatpush1.xpose.msra.mxu0 0.0
    %1593 = vmatprep.subr.mxu0 0.0
    %1594 = vmatpush1.xpose.msra.mxu0 0.0
    %1595 = vmatprep.mubr.f32.mxu0 0.0
    %1596 = vmatmul.mubr.f32.gmra.mrb[0].mxu0 %v869
    %v1597 = vpop.f32.mrb[0].mxu0
    %v1598 = vadd.f32 0.0, %v1597
    %v1599 = vpop.f32.mrb[0].mxu0
    %1600 = vmatprep.mubr.f32.mxu0 0.0
    %1601 = vmatmul.mubr.f32.gmra.mrb[0].mxu0 %v1005
    %v1602 = vpop.f32.mrb[0].mxu0
    %v1603 = vadd.f32 0.0, %v1602
    %v1604 = vpop.f32.mrb[0].mxu0
    %1605 = vdwg.mxu0
    %v1606 = vadd.f32 %v702, %v1073
    %v1607 = vadd.f32 %v703, %v1078
    %v1608 = vadd.f32 %v704, %v1148
    %v1609 = vadd.f32 %v705, %v1153
    %v1610 = vadd.f32 %v706, %v1223
    %v1611 = vadd.f32 %v707, %v1228
    %v1612 = vadd.f32 %v708, %v1298
    %v1613 = vadd.f32 %v709, %v1303
    %v1614 = vadd.f32 %v710, %v1373
    %v1615 = vadd.f32 %v711, %v1378
    %v1616 = vadd.f32 %v712, %v1448
    %v1617 = vadd.f32 %v713, %v1453
    %v1618 = vadd.f32 %v714, %v1523
    %v1619 = vadd.f32 %v715, %v1528
    %v1620 = vadd.f32 %v716, %v1598
    %v1621 = vadd.f32 %v717, %v1603
    %vm1622 = vcmask 64512
    %1623 = vst.msk [vmem:[#allocation3] sm:$0xff] %vm1622, %v1606
    %1624 = vst.msk [vmem:[#allocation3 + $0x8] sm:$0xff] %vm1622, %v1607
    %1625 = vst.msk [vmem:[#allocation3 + $0x10] sm:$0xff] %vm1622, %v1608
    %1626 = vst.msk [vmem:[#allocation3 + $0x18] sm:$0xff] %vm1622, %v1609
    %1627 = vst.msk [vmem:[#allocation3 + $0x20] sm:$0xff] %vm1622, %v1610
    %1628 = vst.msk [vmem:[#allocation3 + $0x28] sm:$0xff] %vm1622, %v1611
    %1629 = vst.msk [vmem:[#allocation3 + $0x30] sm:$0xff] %vm1622, %v1612
    %1630 = vst.msk [vmem:[#allocation3 + $0x38] sm:$0xff] %vm1622, %v1613
    %1631 = vst.msk [vmem:[#allocation3 + $0x40] sm:$0xff] %vm1622, %v1614
    %1632 = vst.msk [vmem:[#allocation3 + $0x48] sm:$0xff] %vm1622, %v1615
    %1633 = vst.msk [vmem:[#allocation3 + $0x50] sm:$0xff] %vm1622, %v1616
    %1634 = vst.msk [vmem:[#allocation3 + $0x58] sm:$0xff] %vm1622, %v1617
    %1635 = vst.msk [vmem:[#allocation3 + $0x60] sm:$0xff] %vm1622, %v1618
    %1636 = vst.msk [vmem:[#allocation3 + $0x68] sm:$0xff] %vm1622, %v1619
    %1637 = vst.msk [vmem:[#allocation3 + $0x70] sm:$0xff] %vm1622, %v1620
    %1638 = vst.msk [vmem:[#allocation3 + $0x78] sm:$0xff] %vm1622, %v1621
    // Predicated region
    $region38: #{tpu_custom_call.1} parent=1 // pred_check
      %p1639 = pneg %p67
    $region39: #{tpu_custom_call.1} parent=1 // pred_check_branch
      %1641 = sbr.rel (%p1639) target = $region41
    $region40: #{tpu_custom_call.1} parent=1 // pred_region
      %v1642 = vld [vmem:[#allocation3] sm:$0xff]
      %v1643 = vld [vmem:[#allocation3 + $0x8] sm:$0xff]
      %v1644 = vld [vmem:[#allocation3 + $0x10] sm:$0xff]
      %v1645 = vld [vmem:[#allocation3 + $0x18] sm:$0xff]
      %v1646 = vld [vmem:[#allocation3 + $0x20] sm:$0xff]
      %v1647 = vld [vmem:[#allocation3 + $0x28] sm:$0xff]
      %v1648 = vld [vmem:[#allocation3 + $0x30] sm:$0xff]
      %v1649 = vld [vmem:[#allocation3 + $0x38] sm:$0xff]
      %v1650 = vld [vmem:[#allocation3 + $0x40] sm:$0xff]
      %v1651 = vld [vmem:[#allocation3 + $0x48] sm:$0xff]
      %v1652 = vld [vmem:[#allocation3 + $0x50] sm:$0xff]
      %v1653 = vld [vmem:[#allocation3 + $0x58] sm:$0xff]
      %v1654 = vld [vmem:[#allocation3 + $0x60] sm:$0xff]
      %v1655 = vld [vmem:[#allocation3 + $0x68] sm:$0xff]
      %v1656 = vld [vmem:[#allocation3 + $0x70] sm:$0xff]
      %v1657 = vld [vmem:[#allocation3 + $0x78] sm:$0xff]
      %v1658 = vcombine.low %v1642, %v1646
      %v1659 = vcombine.high %v1642, %v1646
      %v1661 = vunpack.c.l.s4 1983009808
      %v1662 = vunpack.c.0.s8 %v1661
      %v1663 = vlaneseq
      %v1664 = vshrl.u32 %v1663, 7
      %v1665 = vsub.s32 %v1662, %v1664
      %v1666 = vrot.slane %v1658, %v1665
      %v1668 = vunpack.c.l.s4 1983009808
      %v1669 = vunpack.c.0.s8 %v1668
      %v1670 = vlaneseq
      %v1671 = vshrl.u32 %v1670, 7
      %v1672 = vsub.s32 %v1669, %v1671
      %v1673 = vrot.slane %v1659, %v1672
      %v1674 = vcombine.low %v1644, %v1648
      %v1675 = vcombine.high %v1644, %v1648
      %v1677 = vunpack.c.l.s4 1983009808
      %v1678 = vunpack.c.0.s8 %v1677
      %v1679 = vlaneseq
      %v1680 = vshrl.u32 %v1679, 7
      %v1681 = vsub.s32 %v1678, %v1680
      %v1682 = vrot.slane %v1674, %v1681
      %v1684 = vunpack.c.l.s4 1983009808
      %v1685 = vunpack.c.0.s8 %v1684
      %v1686 = vlaneseq
      %v1687 = vshrl.u32 %v1686, 7
      %v1688 = vsub.s32 %v1685, %v1687
      %v1689 = vrot.slane %v1675, %v1688
      %v1690 = vcombine.low %v1650, %v1654
      %v1691 = vcombine.high %v1650, %v1654
      %v1693 = vunpack.c.l.s4 1983009808
      %v1694 = vunpack.c.0.s8 %v1693
      %v1695 = vlaneseq
      %v1696 = vshrl.u32 %v1695, 7
      %v1697 = vsub.s32 %v1694, %v1696
      %v1698 = vrot.slane %v1690, %v1697
      %v1700 = vunpack.c.l.s4 1983009808
      %v1701 = vunpack.c.0.s8 %v1700
      %v1702 = vlaneseq
      %v1703 = vshrl.u32 %v1702, 7
      %v1704 = vsub.s32 %v1701, %v1703
      %v1705 = vrot.slane %v1691, %v1704
      %v1706 = vcombine.low %v1652, %v1656
      %v1707 = vcombine.high %v1652, %v1656
      %v1709 = vunpack.c.l.s4 1983009808
      %v1710 = vunpack.c.0.s8 %v1709
      %v1711 = vlaneseq
      %v1712 = vshrl.u32 %v1711, 7
      %v1713 = vsub.s32 %v1710, %v1712
      %v1714 = vrot.slane %v1706, %v1713
      %v1716 = vunpack.c.l.s4 1983009808
      %v1717 = vunpack.c.0.s8 %v1716
      %v1718 = vlaneseq
      %v1719 = vshrl.u32 %v1718, 7
      %v1720 = vsub.s32 %v1717, %v1719
      %v1721 = vrot.slane %v1707, %v1720
      %v1722 = vcombine.low %v1666, %v1682
      %v1723 = vcombine.high %v1666, %v1682
      %v1725 = vunpack.c.l.s4 1934713408
      %v1726 = vunpack.c.0.s8 %v1725
      %v1727 = vlaneseq
      %v1728 = vshrl.u32 %v1727, 7
      %v1729 = vsub.s32 %v1726, %v1728
      %v1730 = vrot.slane %v1722, %v1729
      %v1732 = vunpack.c.l.s4 1934713408
      %v1733 = vunpack.c.0.s8 %v1732
      %v1734 = vlaneseq
      %v1735 = vshrl.u32 %v1734, 7
      %v1736 = vsub.s32 %v1733, %v1735
      %v1737 = vrot.slane %v1723, %v1736
      %v1738 = vcombine.low %v1673, %v1689
      %v1739 = vcombine.high %v1673, %v1689
      %v1741 = vunpack.c.l.s4 1934713408
      %v1742 = vunpack.c.0.s8 %v1741
      %v1743 = vlaneseq
      %v1744 = vshrl.u32 %v1743, 7
      %v1745 = vsub.s32 %v1742, %v1744
      %v1746 = vrot.slane %v1738, %v1745
      %v1748 = vunpack.c.l.s4 1934713408
      %v1749 = vunpack.c.0.s8 %v1748
      %v1750 = vlaneseq
      %v1751 = vshrl.u32 %v1750, 7
      %v1752 = vsub.s32 %v1749, %v1751
      %v1753 = vrot.slane %v1739, %v1752
      %v1754 = vcombine.low %v1698, %v1714
      %v1755 = vcombine.high %v1698, %v1714
      %v1757 = vunpack.c.l.s4 1934713408
      %v1758 = vunpack.c.0.s8 %v1757
      %v1759 = vlaneseq
      %v1760 = vshrl.u32 %v1759, 7
      %v1761 = vsub.s32 %v1758, %v1760
      %v1762 = vrot.slane %v1754, %v1761
      %v1764 = vunpack.c.l.s4 1934713408
      %v1765 = vunpack.c.0.s8 %v1764
      %v1766 = vlaneseq
      %v1767 = vshrl.u32 %v1766, 7
      %v1768 = vsub.s32 %v1765, %v1767
      %v1769 = vrot.slane %v1755, %v1768
      %v1770 = vcombine.low %v1705, %v1721
      %v1771 = vcombine.high %v1705, %v1721
      %v1773 = vunpack.c.l.s4 1934713408
      %v1774 = vunpack.c.0.s8 %v1773
      %v1775 = vlaneseq
      %v1776 = vshrl.u32 %v1775, 7
      %v1777 = vsub.s32 %v1774, %v1776
      %v1778 = vrot.slane %v1770, %v1777
      %v1780 = vunpack.c.l.s4 1934713408
      %v1781 = vunpack.c.0.s8 %v1780
      %v1782 = vlaneseq
      %v1783 = vshrl.u32 %v1782, 7
      %v1784 = vsub.s32 %v1781, %v1783
      %v1785 = vrot.slane %v1771, %v1784
      %v1786 = vcombine.low %v1730, %v1762
      %v1787 = vcombine.high %v1730, %v1762
      %v1788 = vcombine.low %v1737, %v1769
      %v1789 = vcombine.high %v1737, %v1769
      %v1790 = vcombine.low %v1746, %v1778
      %v1791 = vcombine.high %v1746, %v1778
      %v1792 = vcombine.low %v1753, %v1785
      %v1793 = vcombine.high %v1753, %v1785
      %v1794 = vcombine.low %v1643, %v1647
      %v1795 = vcombine.high %v1643, %v1647
      %v1797 = vunpack.c.l.s4 1983009808
      %v1798 = vunpack.c.0.s8 %v1797
      %v1799 = vlaneseq
      %v1800 = vshrl.u32 %v1799, 7
      %v1801 = vsub.s32 %v1798, %v1800
      %v1802 = vrot.slane %v1794, %v1801
      %v1804 = vunpack.c.l.s4 1983009808
      %v1805 = vunpack.c.0.s8 %v1804
      %v1806 = vlaneseq
      %v1807 = vshrl.u32 %v1806, 7
      %v1808 = vsub.s32 %v1805, %v1807
      %v1809 = vrot.slane %v1795, %v1808
      %v1810 = vcombine.low %v1645, %v1649
      %v1811 = vcombine.high %v1645, %v1649
      %v1813 = vunpack.c.l.s4 1983009808
      %v1814 = vunpack.c.0.s8 %v1813
      %v1815 = vlaneseq
      %v1816 = vshrl.u32 %v1815, 7
      %v1817 = vsub.s32 %v1814, %v1816
      %v1818 = vrot.slane %v1810, %v1817
      %v1820 = vunpack.c.l.s4 1983009808
      %v1821 = vunpack.c.0.s8 %v1820
      %v1822 = vlaneseq
      %v1823 = vshrl.u32 %v1822, 7
      %v1824 = vsub.s32 %v1821, %v1823
      %v1825 = vrot.slane %v1811, %v1824
      %v1826 = vcombine.low %v1651, %v1655
      %v1827 = vcombine.high %v1651, %v1655
      %v1829 = vunpack.c.l.s4 1983009808
      %v1830 = vunpack.c.0.s8 %v1829
      %v1831 = vlaneseq
      %v1832 = vshrl.u32 %v1831, 7
      %v1833 = vsub.s32 %v1830, %v1832
      %v1834 = vrot.slane %v1826, %v1833
      %v1836 = vunpack.c.l.s4 1983009808
      %v1837 = vunpack.c.0.s8 %v1836
      %v1838 = vlaneseq
      %v1839 = vshrl.u32 %v1838, 7
      %v1840 = vsub.s32 %v1837, %v1839
      %v1841 = vrot.slane %v1827, %v1840
      %v1842 = vcombine.low %v1653, %v1657
      %v1843 = vcombine.high %v1653, %v1657
      %v1845 = vunpack.c.l.s4 1983009808
      %v1846 = vunpack.c.0.s8 %v1845
      %v1847 = vlaneseq
      %v1848 = vshrl.u32 %v1847, 7
      %v1849 = vsub.s32 %v1846, %v1848
      %v1850 = vrot.slane %v1842, %v1849
      %v1852 = vunpack.c.l.s4 1983009808
      %v1853 = vunpack.c.0.s8 %v1852
      %v1854 = vlaneseq
      %v1855 = vshrl.u32 %v1854, 7
      %v1856 = vsub.s32 %v1853, %v1855
      %v1857 = vrot.slane %v1843, %v1856
      %v1858 = vcombine.low %v1802, %v1818
      %v1859 = vcombine.high %v1802, %v1818
      %v1861 = vunpack.c.l.s4 1934713408
      %v1862 = vunpack.c.0.s8 %v1861
      %v1863 = vlaneseq
      %v1864 = vshrl.u32 %v1863, 7
      %v1865 = vsub.s32 %v1862, %v1864
      %v1866 = vrot.slane %v1858, %v1865
      %v1868 = vunpack.c.l.s4 1934713408
      %v1869 = vunpack.c.0.s8 %v1868
      %v1870 = vlaneseq
      %v1871 = vshrl.u32 %v1870, 7
      %v1872 = vsub.s32 %v1869, %v1871
      %v1873 = vrot.slane %v1859, %v1872
      %v1874 = vcombine.low %v1809, %v1825
      %v1875 = vcombine.high %v1809, %v1825
      %v1877 = vunpack.c.l.s4 1934713408
      %v1878 = vunpack.c.0.s8 %v1877
      %v1879 = vlaneseq
      %v1880 = vshrl.u32 %v1879, 7
      %v1881 = vsub.s32 %v1878, %v1880
      %v1882 = vrot.slane %v1874, %v1881
      %v1884 = vunpack.c.l.s4 1934713408
      %v1885 = vunpack.c.0.s8 %v1884
      %v1886 = vlaneseq
      %v1887 = vshrl.u32 %v1886, 7
      %v1888 = vsub.s32 %v1885, %v1887
      %v1889 = vrot.slane %v1875, %v1888
      %v1890 = vcombine.low %v1834, %v1850
      %v1891 = vcombine.high %v1834, %v1850
      %v1893 = vunpack.c.l.s4 1934713408
      %v1894 = vunpack.c.0.s8 %v1893
      %v1895 = vlaneseq
      %v1896 = vshrl.u32 %v1895, 7
      %v1897 = vsub.s32 %v1894, %v1896
      %v1898 = vrot.slane %v1890, %v1897
      %v1900 = vunpack.c.l.s4 1934713408
      %v1901 = vunpack.c.0.s8 %v1900
      %v1902 = vlaneseq
      %v1903 = vshrl.u32 %v1902, 7
      %v1904 = vsub.s32 %v1901, %v1903
      %v1905 = vrot.slane %v1891, %v1904
      %v1906 = vcombine.low %v1841, %v1857
      %v1907 = vcombine.high %v1841, %v1857
      %v1909 = vunpack.c.l.s4 1934713408
      %v1910 = vunpack.c.0.s8 %v1909
      %v1911 = vlaneseq
      %v1912 = vshrl.u32 %v1911, 7
      %v1913 = vsub.s32 %v1910, %v1912
      %v1914 = vrot.slane %v1906, %v1913
      %v1916 = vunpack.c.l.s4 1934713408
      %v1917 = vunpack.c.0.s8 %v1916
      %v1918 = vlaneseq
      %v1919 = vshrl.u32 %v1918, 7
      %v1920 = vsub.s32 %v1917, %v1919
      %v1921 = vrot.slane %v1907, %v1920
      %v1922 = vcombine.low %v1866, %v1898
      %v1923 = vcombine.high %v1866, %v1898
      %v1924 = vcombine.low %v1873, %v1905
      %v1925 = vcombine.high %v1873, %v1905
      %v1926 = vcombine.low %v1882, %v1914
      %v1927 = vcombine.high %v1882, %v1914
      %v1928 = vcombine.low %v1889, %v1921
      %v1929 = vcombine.high %v1889, %v1921
      %1931 = vrot.lane.b32.xlu0 %v1787, 8
      %v1932 = vpop.permute.xlu0 %1931
      %1935 = vrot.lane.b32.xlu0 %v1788, 16
      %v1936 = vpop.permute.xlu0 %1935
      %1939 = vrot.lane.b32.xlu0 %v1789, 24
      %v1940 = vpop.permute.xlu0 %1939
      %1943 = vrot.lane.b32.xlu0 %v1790, 32
      %v1944 = vpop.permute.xlu0 %1943
      %1947 = vrot.lane.b32.xlu0 %v1791, 40
      %v1948 = vpop.permute.xlu0 %1947
      %1951 = vrot.lane.b32.xlu0 %v1792, 48
      %v1952 = vpop.permute.xlu0 %1951
      %1955 = vrot.lane.b32.xlu0 %v1793, 56
      %v1956 = vpop.permute.xlu0 %1955
      %1959 = vrot.lane.b32.xlu0 %v1922, 64
      %v1960 = vpop.permute.xlu0 %1959
      %1963 = vrot.lane.b32.xlu0 %v1923, 72
      %v1964 = vpop.permute.xlu0 %1963
      %1967 = vrot.lane.b32.xlu0 %v1924, 80
      %v1968 = vpop.permute.xlu0 %1967
      %1971 = vrot.lane.b32.xlu0 %v1925, 88
      %v1972 = vpop.permute.xlu0 %1971
      %1975 = vrot.lane.b32.xlu0 %v1926, 96
      %v1976 = vpop.permute.xlu0 %1975
      %1979 = vrot.lane.b32.xlu0 %v1927, 104
      %v1980 = vpop.permute.xlu0 %1979
      %1983 = vrot.lane.b32.xlu0 %v1928, 112
      %v1984 = vpop.permute.xlu0 %1983
      %1987 = vrot.lane.b32.xlu0 %v1929, 120
      %v1988 = vpop.permute.xlu0 %1987
      %v1990 = vsel %vm1622, %v1786, %v1932
      %vm1991 = vcmask 130048
      %v1992 = vsel %vm1991, %v1990, %v1936
      %vm1993 = vcmask 195584
      %v1994 = vsel %vm1993, %v1992, %v1940
      %vm1995 = vcmask 261120
      %v1996 = vsel %vm1995, %v1994, %v1944
      %vm1997 = vcmask 326656
      %v1998 = vsel %vm1997, %v1996, %v1948
      %vm1999 = vcmask 392192
      %v2000 = vsel %vm1999, %v1998, %v1952
      %vm2001 = vcmask 457728
      %v2002 = vsel %vm2001, %v2000, %v1956
      %vm2003 = vcmask 523264
      %v2004 = vsel %vm2003, %v2002, %v1960
      %vm2005 = vcmask 588800
      %v2006 = vsel %vm2005, %v2004, %v1964
      %vm2007 = vcmask 654336
      %v2008 = vsel %vm2007, %v2006, %v1968
      %vm2009 = vcmask 719872
      %v2010 = vsel %vm2009, %v2008, %v1972
      %vm2011 = vcmask 785408
      %v2012 = vsel %vm2011, %v2010, %v1976
      %vm2013 = vcmask 850944
      %v2014 = vsel %vm2013, %v2012, %v1980
      %vm2015 = vcmask 916480
      %v2016 = vsel %vm2015, %v2014, %v1984
      %vm2017 = vcmask 982016
      %v2018 = vsel %vm2017, %v2016, %v1988
      %2019 = vst [vmem:[#allocation12] sm:$0xff] %v2018
    $region41: #{tpu_custom_call.1} parent=1 // pred_fallthru
      _
    // Predicated region
    $region42: #{tpu_custom_call.1} parent=1 // pred_check
      _
    $region43: #{tpu_custom_call.1} parent=1 // pred_check_branch
      %2021 = sbr.rel (0) target = $region45
    $region44: #{tpu_custom_call.1} parent=1 // pred_region
      %s2023 = ssub.s32 128, 128
      %2024 = vsyncadd [#allocation6], %s2023
      %s2026 = sshll.u32 [#allocation12], 4
      %s2027 = int_to_ptr.vmem [resolvable:$true] %s2026
      %2029 = dma.vmem_to_hbm [thread:$0]  %s2027, 128, %s4, [#allocation6]
    $region45: #{tpu_custom_call.1} parent=1 // pred_fallthru
      _
    // Predicated region
    $region46: #{tpu_custom_call.1} parent=1 // pred_check
      _
    $region47: #{tpu_custom_call.1} parent=1 // pred_check_branch
      %2031 = sbr.rel (0) target = $region49
    $region48: #{tpu_custom_call.1} parent=1 // pred_region
      %2032 = dma.done [#allocation6], 128
    $region49: #{tpu_custom_call.1} parent=1 // pred_fallthru
      _
    %2033 = vsyncpa [#allocation5], 1
    %2034 = vsyncpa [#allocation8], 1
    %2035 = vsyncpa [#allocation11], 1
    %2036 = vsyncpa [#allocation6], 1

</llo_original>
